<compile_context>
chip_gen: v7x
topology: tpu7x:2x2x1
jax: 0.10.0
libtpu: 0.0.40
codegen_flags: <defaults>
</compile_context>

<pallas_src>
import jax
import jax.numpy as jnp
from jax.experimental import pallas as pl
from jax.experimental.pallas import tpu as pltpu

NUM_BOND_TYPE = 6        # vocabulary sizes from the GraphMAE / pretrain-gnns chem code
NUM_BOND_DIRECTION = 3
SELF_LOOP_BOND_TYPE = 4  # GINConv uses edge_attr = [4, 0] for the added self loops

LANE = 128               # TPU lane width


def _round_up(a, b):
    return ((a + b - 1) // b) * b


def _pad2(a, rows, cols, dtype=None):
    a = jnp.pad(a, ((0, rows - a.shape[0]), (0, cols - a.shape[1])))
    return a.astype(dtype) if dtype is not None else a


def _tiles(np_rows):
    """Row tile TM and adjacency-column (reduction) tile TK, both dividing np_rows."""
    tm = 256 if np_rows % 256 == 0 else 128
    tk = max(t for t in (1024, 512, 256, 128) if np_rows % t == 0)
    return tm, tk


# ----------------------------- Pallas kernels ------------------------------

def _h_kernel(alpha_ref, x_ref, w_ref, h_ref):
    """h = PReLU(x) @ W_enc2dec   (bf16 output, f32 MXU accumulation)."""
    alpha = alpha_ref[0]                                    # scalar from SMEM
    x = x_ref[...].astype(jnp.float32)                      # bf16 stream, f32 compute
    a = jnp.where(x >= 0.0, x, alpha * x)
    h = jnp.dot(a.astype(jnp.bfloat16), w_ref[...],
                preferred_element_type=jnp.float32)
    h_ref[...] = h.astype(jnp.bfloat16)


def _gin_agg_mlp_kernel(cids_ref, cnt_ref, adj_ref, h_ref, es_ref,
                        w1_ref, b1_ref, w2_ref, b2_ref, out_ref, acc_ref):
    """agg = adj @ h + eemb_sum (sparse-block-skipped reduction over adjacency columns);
       out = relu(agg @ W1 + b1) @ W2 + b2 at the last reduction step.
       h is resident in VMEM (full array); the needed (TK, HP) slab is cut with pl.ds."""
    i = pl.program_id(0)
    k = pl.program_id(1)
    n_k = pl.num_programs(1)
    tk = adj_ref.shape[1]

    @pl.when(k == 0)
    def _():
        acc_ref[...] = es_ref[...]                          # init with edge-embedding sums

    @pl.when(k < cnt_ref[i])                                # skip padded / all-zero blocks
    def _():
        c = cids_ref[i * n_k + k]                           # column-block id from SMEM schedule
        start = pl.multiple_of(c * tk, tk)
        h_blk = h_ref[pl.ds(start, tk), :]
        acc_ref[...] += jnp.dot(adj_ref[...], h_blk,
                                preferred_element_type=jnp.float32)

    @pl.when(k == n_k - 1)
    def _():
        agg = acc_ref[...].astype(jnp.bfloat16)
        z = jnp.dot(agg, w1_ref[...], preferred_element_type=jnp.float32) + b1_ref[...]
        z = jnp.maximum(z, 0.0)
        out_ref[...] = (jnp.dot(z.astype(jnp.bfloat16), w2_ref[...],
                                preferred_element_type=jnp.float32) + b2_ref[...])


def _linear_kernel(x_ref, w_ref, b_ref, out_ref):
    out_ref[...] = (jnp.dot(x_ref[...], w_ref[...],
                            preferred_element_type=jnp.float32) + b_ref[...])


# ------------------------------- wrappers ----------------------------------

def predictor_forward_gin(params, x, edge_index, edge_attr, mask_node_indices):
    """Predictor.forward with nn_type='gin'."""
    N, H = x.shape
    O = params['w2'].shape[1]

    # ---- padding / tiling geometry (lane-dense, MXU-friendly) ----
    NP = _round_up(max(N, 8), LANE)          # only to a lane multiple -> no quadratic tile cliff
    HP = _round_up(max(H, LANE), LANE)
    H2P = _round_up(max(2 * H, LANE), LANE)
    OP = _round_up(max(O, LANE), LANE)
    TM, TK = _tiles(NP)
    n_row = NP // TM
    n_k = NP // TK

    src, dst = edge_index[0], edge_index[1]

    # --- glue: add self loops (edge_attr = [4, 0]) ---
    loop = jnp.arange(N, dtype=src.dtype)
    src_f = jnp.concatenate([src, loop])
    dst_f = jnp.concatenate([dst, loop])
    ea = jnp.concatenate(
        [edge_attr,
         jnp.stack([jnp.full((N,), SELF_LOOP_BOND_TYPE, edge_attr.dtype),
                    jnp.zeros((N,), edge_attr.dtype)], axis=1)], axis=0)

    # --- glue: per-node sum of edge embeddings (scatter-add; no (N,E) one-hot matmul) ---
    eemb = (params['emb_bond_type'][ea[:, 0]] +
            params['emb_bond_dir'][ea[:, 1]]).astype(jnp.float32)          # (E_tot, H)
    eemb_sum = jnp.zeros((NP, H), jnp.float32).at[dst_f].add(eemb)
    eemb_sum = jnp.pad(eemb_sum, ((0, 0), (0, HP - H)))                    # (NP, HP)

    # --- glue: keep mask (x[mask]=0 before conv) folded into the adjacency SOURCE columns,
    #     built in ONE fused bf16 scatter.  Invalid / -1 padded mask entries go to a dump slot.
    safe_idx = jnp.where((mask_node_indices >= 0) & (mask_node_indices < N),
                         mask_node_indices, N)
    keep = jnp.ones((N + 1,), jnp.float32).at[safe_idx].set(0.0)[:N]
    # bf16 accumulation of edge multiplicities is exact up to 256 duplicates per (dst, src) pair.
    adj = jnp.zeros((NP, NP), jnp.bfloat16).at[dst_f, src_f].add(
        keep[src_f].astype(jnp.bfloat16))

    # --- glue: per-row-block non-zero column-block schedule (scalar-prefetched into SMEM) ---
    rb = dst_f // TM
    cb = src_f // TK
    occ = (jnp.zeros((n_row, n_k), jnp.int32).at[rb, cb].add(1)) > 0       # block occupancy
    order = jnp.argsort((~occ).astype(jnp.int32), axis=1).astype(jnp.int32)  # occupied first
    cnt = occ.sum(axis=1).astype(jnp.int32)                                # non-zero blocks / row
    last_valid = order[jnp.arange(n_row), jnp.maximum(cnt - 1, 0)]
    col_ids = jnp.where(jnp.arange(n_k)[None, :] < cnt[:, None],
                        order, last_valid[:, None]).astype(jnp.int32)      # tail repeats -> no DMA
    col_ids = col_ids.reshape(-1)                                          # flat 1D SMEM layout

    # --- padded / bf16 operands ---
    x_p = _pad2(x, NP, HP, jnp.bfloat16)
    w_e2d = _pad2(params['w_e2d'], HP, HP, jnp.bfloat16)
    w1 = _pad2(params['w1'], HP, H2P, jnp.bfloat16)
    b1 = _pad2(params['b1'], 1, H2P).astype(jnp.float32)
    w2 = _pad2(params['w2'], H2P, OP, jnp.bfloat16)
    b2 = _pad2(params['b2'], 1, OP).astype(jnp.float32)
    alpha = params['alpha'].reshape((1,)).astype(jnp.float32)

    # ---- kernel 1: h = PReLU(x) @ W_e2d (row tiled, parallel) ----
    k1_vmem = int(max(2 * (TM * HP * 2 + HP * HP * 2 + TM * HP * 2) + (2 << 20), 32 << 20))
    h = pl.pallas_call(
        _h_kernel,
        out_shape=jax.ShapeDtypeStruct((NP, HP), jnp.bfloat16),
        grid=(n_row,),
        in_specs=[
            pl.BlockSpec(memory_space=pltpu.MemorySpace.SMEM),      # alpha (scalar)
            pl.BlockSpec((TM, HP), lambda i: (i, 0)),               # x (bf16)
            pl.BlockSpec((HP, HP), lambda i: (0, 0)),               # w_e2d
        ],
        out_specs=pl.BlockSpec((TM, HP), lambda i: (i, 0)),
        compiler_params=pltpu.CompilerParams(
            dimension_semantics=("parallel",),
            vmem_limit_bytes=k1_vmem),
        cost_estimate=pl.CostEstimate(
            flops=2 * NP * HP * HP, transcendentals=0,
            bytes_accessed=NP * HP * 2 + HP * HP * 2 + NP * HP * 2),
    )(alpha, x_p, w_e2d)

    # ---- kernel 2: agg = adj @ h + eemb_sum (sparse block skip) ; out = MLP(agg) ----
    k2_vmem = (2 * (TM * TK * 2 + TM * HP * 4 + TM * OP * 4
                    + HP * H2P * 2 + H2P * 4 + H2P * OP * 2 + OP * 4)
               + 2 * NP * HP * 2          # resident h (double-buffered allocation)
               + TM * HP * 4)             # f32 accumulator
    k2_vmem = int(max(k2_vmem + (4 << 20), 32 << 20))

    grid_spec = pltpu.PrefetchScalarGridSpec(
        num_scalar_prefetch=2,
        grid=(n_row, n_k),
        in_specs=[
            pl.BlockSpec((TM, TK), lambda i, k, cids, cnt: (i, cids[i * n_k + k])),  # adj (bf16)
            pl.BlockSpec((NP, HP), lambda i, k, cids, cnt: (0, 0)),                  # h resident
            pl.BlockSpec((TM, HP), lambda i, k, cids, cnt: (i, 0)),                  # eemb_sum f32
            pl.BlockSpec((HP, H2P), lambda i, k, cids, cnt: (0, 0)),                 # w1
            pl.BlockSpec((1, H2P), lambda i, k, cids, cnt: (0, 0)),                  # b1
            pl.BlockSpec((H2P, OP), lambda i, k, cids, cnt: (0, 0)),                 # w2
            pl.BlockSpec((1, OP), lambda i, k, cids, cnt: (0, 0)),                   # b2
        ],
        out_specs=pl.BlockSpec((TM, OP), lambda i, k, cids, cnt: (i, 0)),
        scratch_shapes=[pltpu.VMEM((TM, HP), jnp.float32)],
    )

    out_p = pl.pallas_call(
        _gin_agg_mlp_kernel,
        out_shape=jax.ShapeDtypeStruct((NP, OP), jnp.float32),
        grid_spec=grid_spec,
        compiler_params=pltpu.CompilerParams(
            dimension_semantics=("parallel", "arbitrary"),
            vmem_limit_bytes=k2_vmem),
        cost_estimate=pl.CostEstimate(
            flops=2 * NP * NP * HP + 2 * NP * HP * H2P + 2 * NP * H2P * OP,
            transcendentals=0,
            bytes_accessed=(NP * NP * 2 + NP * HP * 2 + NP * HP * 4
                            + NP * OP * 4 + HP * H2P * 2 + H2P * OP * 2)),
    )(col_ids, cnt, adj, h, eemb_sum, w1, b1, w2, b2)

    return out_p[:N, :O]


def predictor_forward_linear(params, x):
    """Predictor.forward with nn_type='linear' (out = self.dec(x))."""
    N, H = x.shape
    O = params['w_dec'].shape[1]
    NP = _round_up(max(N, 8), LANE)
    HP = _round_up(max(H, LANE), LANE)
    OP = _round_up(max(O, LANE), LANE)
    TM, _ = _tiles(NP)

    x_p = _pad2(x, NP, HP, jnp.bfloat16)
    w = _pad2(params['w_dec'], HP, OP, jnp.bfloat16)
    b = _pad2(params['b_dec'], 1, OP).astype(jnp.float32)

    vmem = int(max(2 * (TM * HP * 2 + HP * OP * 2 + OP * 4 + TM * OP * 4) + (2 << 20), 32 << 20))
    out_p = pl.pallas_call(
        _linear_kernel,
        out_shape=jax.ShapeDtypeStruct((NP, OP), jnp.float32),
        grid=(NP // TM,),
        in_specs=[
            pl.BlockSpec((TM, HP), lambda i: (i, 0)),
            pl.BlockSpec((HP, OP), lambda i: (0, 0)),
            pl.BlockSpec((1, OP), lambda i: (0, 0)),
        ],
        out_specs=pl.BlockSpec((TM, OP), lambda i: (i, 0)),
        compiler_params=pltpu.CompilerParams(
            dimension_semantics=("parallel",),
            vmem_limit_bytes=vmem),
        cost_estimate=pl.CostEstimate(
            flops=2 * NP * HP * OP, transcendentals=0,
            bytes_accessed=NP * HP * 2 + HP * OP * 2 + NP * OP * 4),
    )(x_p, w, b)
    return out_p[:N, :O]


# TODO(synk): the 'gcn' nn_type branch of Predictor is not implemented (default is 'gin').


# --------------------------- deterministic params --------------------------

def init_params(key, hidden_size, output_size):
    ks = jax.random.split(key, 6)
    s = 0.1
    f32 = jnp.float32
    return dict(
        alpha=jnp.full((1, 1), 0.25, f32),                     # PReLU weight (init 0.25)
        w_e2d=(jax.random.normal(ks[0], (hidden_size, hidden_size)) * s).astype(f32),
        emb_bond_type=(jax.random.normal(ks[1], (NUM_BOND_TYPE, hidden_size)) * s).astype(f32),
        emb_bond_dir=(jax.random.normal(ks[2], (NUM_BOND_DIRECTION, hidden_size)) * s).astype(f32),
        w1=(jax.random.normal(ks[3], (hidden_size, 2 * hidden_size)) * s).astype(f32),
        b1=jnp.zeros((1, 2 * hidden_size), f32),
        w2=(jax.random.normal(ks[4], (2 * hidden_size, output_size)) * s).astype(f32),
        b2=jnp.zeros((1, output_size), f32),
        # 'linear' decoder path
        w_dec=(jax.random.normal(ks[5], (hidden_size, output_size)) * s).astype(f32),
        b_dec=jnp.zeros((1, output_size), f32),
    )


# ----------------------------- pure-JAX reference ---------------------------

def _reference_gin(params, x, edge_index, edge_attr, mask_node_indices):
    N = x.shape[0]
    hp = jax.lax.Precision.HIGHEST
    alpha = params['alpha'][0, 0]
    h = jnp.where(x >= 0.0, x, alpha * x)
    h = jnp.dot(h, params['w_e2d'], precision=hp)
    h = h.at[mask_node_indices].set(0.0)
    src, dst = edge_index[0], edge_index[1]
    loop = jnp.arange(N, dtype=src.dtype)
    src_f = jnp.concatenate([src, loop])
    dst_f = jnp.concatenate([dst, loop])
    ea = jnp.concatenate(
        [edge_attr,
         jnp.stack([jnp.full((N,), SELF_LOOP_BOND_TYPE, edge_attr.dtype),
                    jnp.zeros((N,), edge_attr.dtype)], axis=1)], axis=0)
    eemb = params['emb_bond_type'][ea[:, 0]] + params['emb_bond_dir'][ea[:, 1]]
    msg = h[src_f] + eemb
    agg = jnp.zeros_like(h).at[dst_f].add(msg)
    z = jnp.maximum(jnp.dot(agg, params['w1'], precision=hp) + params['b1'], 0.0)
    return jnp.dot(z, params['w2'], precision=hp) + params['b2']


# ----------------------------------- main -----------------------------------

if __name__ == "__main__":
    N, H, O, E = 8, 32, 16, 16
    key = jax.random.PRNGKey(0)
    kx, ke, ka, kb, kp = jax.random.split(key, 5)

    x = jax.random.normal(kx, (N, H), jnp.float32)
    edge_index = jax.random.randint(ke, (2, E), 0, N, dtype=jnp.int32)
    edge_attr = jnp.stack(
        [jax.random.randint(ka, (E,), 0, NUM_BOND_TYPE - 2, dtype=jnp.int32),
         jax.random.randint(kb, (E,), 0, NUM_BOND_DIRECTION, dtype=jnp.int32)],
        axis=1)
    mask_node_indices = jnp.array([1, 4, 6], dtype=jnp.int32)

    params = init_params(kp, H, O)

    out_gin = jax.block_until_ready(
        jax.jit(predictor_forward_gin)(params, x, edge_index, edge_attr, mask_node_indices))
    out_lin = jax.block_until_ready(jax.jit(predictor_forward_linear)(params, x))

    ref_gin = _reference_gin(params, x, edge_index, edge_attr, mask_node_indices)
    ref_lin = jnp.dot(x, params['w_dec'], precision=jax.lax.Precision.HIGHEST) + params['b_dec']

    assert out_gin.shape == (N, O) and out_lin.shape == (N, O)
    # Tolerance covers bf16 MXU operands / bf16 x stream (f32 accumulation everywhere);
    # adjacency counts and edge multiplicities are exact in bf16.
    assert jnp.allclose(out_gin, ref_gin, atol=3e-2, rtol=3e-2), "gin path mismatch"
    assert jnp.allclose(out_lin, ref_lin, atol=3e-2, rtol=3e-2), "linear path mismatch"

    print("KERNEL_OK")
</pallas_src>

<mosaic_0001>
module attributes {stable_mosaic.version = 11 : i64} {
  func.func @_h_kernel(%arg0: i32, %arg1: memref<1xf32, #tpu.memory_space<smem>>, %arg2: memref<128x128xbf16, #tpu.memory_space<vmem>>, %arg3: memref<128x128xbf16, #tpu.memory_space<vmem>>, %arg4: memref<128x128xbf16, #tpu.memory_space<vmem>>) attributes {dimension_semantics = [#tpu.dimension_semantics<parallel>], iteration_bounds = array<i64: 1>, scalar_prefetch = 0 : i64, scratch_operands = 0 : i64, tpu.core_type = #tpu.core_type<tc>, window_params = [{transform_indices = @transform_0, window_bounds = array<i64: 1>}, {transform_indices = @transform_1, window_bounds = array<i64: 128, 128>}, {pipeline_mode = #tpu.pipeline_mode<synchronous>, transform_indices = @transform_2, window_bounds = array<i64: 128, 128>}, {transform_indices = @transform_3, window_bounds = array<i64: 128, 128>}]} {
    %c0 = arith.constant 0 : index
    %0 = memref.load %arg1[%c0] : memref<1xf32, #tpu.memory_space<smem>>
    %c0_0 = arith.constant 0 : index
    %c0_1 = arith.constant 0 : index
    %1 = vector.load %arg2[%c0_0, %c0_1] : memref<128x128xbf16, #tpu.memory_space<vmem>>, vector<128x128xbf16>
    %2 = arith.extf %1 : vector<128x128xbf16> to vector<128x128xf32>
    %cst = arith.constant 0.000000e+00 : f32
    %3 = vector.broadcast %cst : f32 to vector<128x128xf32>
    %4 = arith.cmpf oge, %2, %3 : vector<128x128xf32>
    %5 = vector.broadcast %0 : f32 to vector<128x128xf32>
    %6 = arith.mulf %5, %2 : vector<128x128xf32>
    %7 = arith.select %4, %2, %6 : vector<128x128xi1>, vector<128x128xf32>
    %8 = arith.truncf %7 : vector<128x128xf32> to vector<128x128xbf16>
    %c0_2 = arith.constant 0 : index
    %c0_3 = arith.constant 0 : index
    %9 = vector.load %arg3[%c0_2, %c0_3] : memref<128x128xbf16, #tpu.memory_space<vmem>>, vector<128x128xbf16>
    %cst_4 = arith.constant dense<0.000000e+00> : vector<128x128xf32>
    %10 = tpu.matmul %8, %9, %cst_4 {dimension_numbers = #tpu.dot_dimension_numbers<[1], [0], [0], [1], [0, 0, 1, 1], [], []>} : vector<128x128xbf16>, vector<128x128xbf16>, vector<128x128xf32> -> vector<128x128xf32>
    %11 = arith.truncf %10 : vector<128x128xf32> to vector<128x128xbf16>
    %c0_5 = arith.constant 0 : index
    %c0_6 = arith.constant 0 : index
    %12 = vector.load %arg4[%c0_5, %c0_6] : memref<128x128xbf16, #tpu.memory_space<vmem>>, vector<128x128xbf16>
    tpu.vector_store %arg4[%c0_5, %c0_6], %11 {strides = array<i32>} : memref<128x128xbf16, #tpu.memory_space<vmem>>, vector<128x128xbf16>,
    return
  }
  func.func @transform_0(%arg0: i32) -> i32 {
    %c0_i32 = arith.constant 0 : i32
    %c0_i32_0 = arith.constant 0 : i32
    return %c0_i32 : i32
  }
  func.func @transform_1(%arg0: i32) -> (i32, i32) {
    %c0_i32 = arith.constant 0 : i32
    %c0_i32_0 = arith.constant 0 : i32
    return %arg0, %c0_i32 : i32, i32
  }
  func.func @transform_2(%arg0: i32) -> (i32, i32) {
    %c0_i32 = arith.constant 0 : i32
    %c0_i32_0 = arith.constant 0 : i32
    %c0_i32_1 = arith.constant 0 : i32
    return %c0_i32, %c0_i32_0 : i32, i32
  }
  func.func @transform_3(%arg0: i32) -> (i32, i32) {
    %c0_i32 = arith.constant 0 : i32
    %c0_i32_0 = arith.constant 0 : i32
    return %arg0, %c0_i32 : i32, i32
  }
}

module attributes {stable_mosaic.version = 11 : i64} {
  func.func @_gin_agg_mlp_kernel(%arg0: i32, %arg1: i32, %arg2: memref<1xi32, #tpu.memory_space<smem>>, %arg3: memref<1xi32, #tpu.memory_space<smem>>, %arg4: memref<128x128xbf16, #tpu.memory_space<vmem>>, %arg5: memref<128x128xbf16, #tpu.memory_space<vmem>>, %arg6: memref<128x128xf32, #tpu.memory_space<vmem>>, %arg7: memref<128x128xbf16, #tpu.memory_space<vmem>>, %arg8: memref<1x128xf32, #tpu.memory_space<vmem>>, %arg9: memref<128x128xbf16, #tpu.memory_space<vmem>>, %arg10: memref<1x128xf32, #tpu.memory_space<vmem>>, %arg11: memref<128x128xf32, #tpu.memory_space<vmem>>, %arg12: memref<128x128xf32, #tpu.memory_space<vmem>>) attributes {dimension_semantics = [#tpu.dimension_semantics<parallel>, #tpu.dimension_semantics<arbitrary>], iteration_bounds = array<i64: 1, 1>, scalar_prefetch = 2 : i64, scratch_operands = 1 : i64, tpu.core_type = #tpu.core_type<tc>, window_params = [{transform_indices = @transform_0, window_bounds = array<i64: 128, 128>}, {pipeline_mode = #tpu.pipeline_mode<synchronous>, transform_indices = @transform_1, window_bounds = array<i64: 128, 128>}, {transform_indices = @transform_2, window_bounds = array<i64: 128, 128>}, {pipeline_mode = #tpu.pipeline_mode<synchronous>, transform_indices = @transform_3, window_bounds = array<i64: 128, 128>}, {pipeline_mode = #tpu.pipeline_mode<synchronous>, transform_indices = @transform_4, window_bounds = array<i64: 1, 128>}, {pipeline_mode = #tpu.pipeline_mode<synchronous>, transform_indices = @transform_5, window_bounds = array<i64: 128, 128>}, {pipeline_mode = #tpu.pipeline_mode<synchronous>, transform_indices = @transform_6, window_bounds = array<i64: 1, 128>}, {transform_indices = @transform_7, window_bounds = array<i64: 128, 128>}]} {
    %c0_i32 = arith.constant 0 : i32
    %0 = arith.cmpi eq, %arg1, %c0_i32 : i32
    %1 = arith.extui %0 : i1 to i32
    %c0_i32_0 = arith.constant 0 : i32
    %2 = arith.cmpi ne, %1, %c0_i32_0 : i32
    scf.if %2 {
      %c0 = arith.constant 0 : index
      %c0_4 = arith.constant 0 : index
      %11 = vector.load %arg6[%c0, %c0_4] : memref<128x128xf32, #tpu.memory_space<vmem>>, vector<128x128xf32>
      %c0_5 = arith.constant 0 : index
      %c0_6 = arith.constant 0 : index
      %12 = vector.load %arg12[%c0_5, %c0_6] : memref<128x128xf32, #tpu.memory_space<vmem>>, vector<128x128xf32>
      tpu.vector_store %arg12[%c0_5, %c0_6], %11 {strides = array<i32>} : memref<128x128xf32, #tpu.memory_space<vmem>>, vector<128x128xf32>,
    } else {
    }
    %3 = arith.index_cast %arg0 : i32 to index
    %4 = memref.load %arg3[%3] : memref<1xi32, #tpu.memory_space<smem>>
    %5 = arith.cmpi slt, %arg1, %4 : i32
    %6 = arith.extui %5 : i1 to i32
    %c0_i32_1 = arith.constant 0 : i32
    %7 = arith.cmpi ne, %6, %c0_i32_1 : i32
    scf.if %7 {
      %c1_i32 = arith.constant 1 : i32
      %11 = arith.muli %arg0, %c1_i32 : i32
      %12 = arith.addi %11, %arg1 : i32
      %13 = arith.index_cast %12 : i32 to index
      %14 = memref.load %arg2[%13] : memref<1xi32, #tpu.memory_space<smem>>
      %c128_i32 = arith.constant 128 : i32
      %15 = arith.muli %14, %c128_i32 : i32
      %16 = tpu.assume_multiple %15, 128 : i32
      %17 = arith.index_cast %16 : i32 to index
      %c0 = arith.constant 0 : index
      %18 = vector.load %arg5[%17, %c0] : memref<128x128xbf16, #tpu.memory_space<vmem>>, vector<128x128xbf16>
      %c0_4 = arith.constant 0 : index
      %c0_5 = arith.constant 0 : index
      %19 = vector.load %arg12[%c0_4, %c0_5] : memref<128x128xf32, #tpu.memory_space<vmem>>, vector<128x128xf32>
      %c0_6 = arith.constant 0 : index
      %c0_7 = arith.constant 0 : index
      %20 = vector.load %arg4[%c0_6, %c0_7] : memref<128x128xbf16, #tpu.memory_space<vmem>>, vector<128x128xbf16>
      %cst = arith.constant dense<0.000000e+00> : vector<128x128xf32>
      %21 = tpu.matmul %20, %18, %cst {dimension_numbers = #tpu.dot_dimension_numbers<[1], [0], [0], [1], [0, 0, 1, 1], [], []>} : vector<128x128xbf16>, vector<128x128xbf16>, vector<128x128xf32> -> vector<128x128xf32>
      %22 = arith.addf %19, %21 : vector<128x128xf32>
      %c0_8 = arith.constant 0 : index
      %c0_9 = arith.constant 0 : index
      %23 = vector.load %arg12[%c0_8, %c0_9] : memref<128x128xf32, #tpu.memory_space<vmem>>, vector<128x128xf32>
      tpu.vector_store %arg12[%c0_8, %c0_9], %22 {strides = array<i32>} : memref<128x128xf32, #tpu.memory_space<vmem>>, vector<128x128xf32>,
    } else {
    }
    %c0_i32_2 = arith.constant 0 : i32
    %8 = arith.cmpi eq, %arg1, %c0_i32_2 : i32
    %9 = arith.extui %8 : i1 to i32
    %c0_i32_3 = arith.constant 0 : i32
    %10 = arith.cmpi ne, %9, %c0_i32_3 : i32
    scf.if %10 {
      %c0 = arith.constant 0 : index
      %c0_4 = arith.constant 0 : index
      %11 = vector.load %arg12[%c0, %c0_4] : memref<128x128xf32, #tpu.memory_space<vmem>>, vector<128x128xf32>
      %12 = arith.truncf %11 : vector<128x128xf32> to vector<128x128xbf16>
      %c0_5 = arith.constant 0 : index
      %c0_6 = arith.constant 0 : index
      %13 = vector.load %arg7[%c0_5, %c0_6] : memref<128x128xbf16, #tpu.memory_space<vmem>>, vector<128x128xbf16>
      %cst = arith.constant dense<0.000000e+00> : vector<128x128xf32>
      %14 = tpu.matmul %12, %13, %cst {dimension_numbers = #tpu.dot_dimension_numbers<[1], [0], [0], [1], [0, 0, 1, 1], [], []>} : vector<128x128xbf16>, vector<128x128xbf16>, vector<128x128xf32> -> vector<128x128xf32>
      %c0_7 = arith.constant 0 : index
      %c0_8 = arith.constant 0 : index
      %15 = vector.load %arg8[%c0_7, %c0_8] : memref<1x128xf32, #tpu.memory_space<vmem>>, vector<1x128xf32>
      %16 = vector.broadcast %15 : vector<1x128xf32> to vector<128x128xf32>
      %17 = arith.addf %14, %16 : vector<128x128xf32>
      %cst_9 = arith.constant 0.000000e+00 : f32
      %18 = vector.broadcast %cst_9 : f32 to vector<128x128xf32>
      %19 = arith.maximumf %17, %18 : vector<128x128xf32>
      %20 = arith.truncf %19 : vector<128x128xf32> to vector<128x128xbf16>
      %c0_10 = arith.constant 0 : index
      %c0_11 = arith.constant 0 : index
      %21 = vector.load %arg9[%c0_10, %c0_11] : memref<128x128xbf16, #tpu.memory_space<vmem>>, vector<128x128xbf16>
      %cst_12 = arith.constant dense<0.000000e+00> : vector<128x128xf32>
      %22 = tpu.matmul %20, %21, %cst_12 {dimension_numbers = #tpu.dot_dimension_numbers<[1], [0], [0], [1], [0, 0, 1, 1], [], []>} : vector<128x128xbf16>, vector<128x128xbf16>, vector<128x128xf32> -> vector<128x128xf32>
      %c0_13 = arith.constant 0 : index
      %c0_14 = arith.constant 0 : index
      %23 = vector.load %arg10[%c0_13, %c0_14] : memref<1x128xf32, #tpu.memory_space<vmem>>, vector<1x128xf32>
      %24 = vector.broadcast %23 : vector<1x128xf32> to vector<128x128xf32>
      %25 = arith.addf %22, %24 : vector<128x128xf32>
      %c0_15 = arith.constant 0 : index
      %c0_16 = arith.constant 0 : index
      %26 = vector.load %arg11[%c0_15, %c0_16] : memref<128x128xf32, #tpu.memory_space<vmem>>, vector<128x128xf32>
      tpu.vector_store %arg11[%c0_15, %c0_16], %25 {strides = array<i32>} : memref<128x128xf32, #tpu.memory_space<vmem>>, vector<128x128xf32>,
    } else {
    }
    return
  }
  func.func @transform_0(%arg0: i32, %arg1: i32, %arg2: memref<1xi32, #tpu.memory_space<smem>>, %arg3: memref<1xi32, #tpu.memory_space<smem>>) -> (i32, i32) {
    %c1_i32 = arith.constant 1 : i32
    %0 = arith.muli %arg0, %c1_i32 : i32
    %1 = arith.addi %0, %arg1 : i32
    %2 = arith.index_cast %1 : i32 to index
    %3 = memref.load %arg2[%2] : memref<1xi32, #tpu.memory_space<smem>>
    %c0_i32 = arith.constant 0 : i32
    return %arg0, %3 : i32, i32
  }
  func.func @transform_1(%arg0: i32, %arg1: i32, %arg2: memref<1xi32, #tpu.memory_space<smem>>, %arg3: memref<1xi32, #tpu.memory_space<smem>>) -> (i32, i32) {
    %c0_i32 = arith.constant 0 : i32
    %c0_i32_0 = arith.constant 0 : i32
    %c0_i32_1 = arith.constant 0 : i32
    return %c0_i32, %c0_i32_0 : i32, i32
  }
  func.func @transform_2(%arg0: i32, %arg1: i32, %arg2: memref<1xi32, #tpu.memory_space<smem>>, %arg3: memref<1xi32, #tpu.memory_space<smem>>) -> (i32, i32) {
    %c0_i32 = arith.constant 0 : i32
    %c0_i32_0 = arith.constant 0 : i32
    return %arg0, %c0_i32 : i32, i32
  }
  func.func @transform_3(%arg0: i32, %arg1: i32, %arg2: memref<1xi32, #tpu.memory_space<smem>>, %arg3: memref<1xi32, #tpu.memory_space<smem>>) -> (i32, i32) {
    %c0_i32 = arith.constant 0 : i32
    %c0_i32_0 = arith.constant 0 : i32
    %c0_i32_1 = arith.constant 0 : i32
    return %c0_i32, %c0_i32_0 : i32, i32
  }
  func.func @transform_4(%arg0: i32, %arg1: i32, %arg2: memref<1xi32, #tpu.memory_space<smem>>, %arg3: memref<1xi32, #tpu.memory_space<smem>>) -> (i32, i32) {
    %c0_i32 = arith.constant 0 : i32
    %c0_i32_0 = arith.constant 0 : i32
    %c0_i32_1 = arith.constant 0 : i32
    return %c0_i32, %c0_i32_0 : i32, i32
  }
  func.func @transform_5(%arg0: i32, %arg1: i32, %arg2: memref<1xi32, #tpu.memory_space<smem>>, %arg3: memref<1xi32, #tpu.memory_space<smem>>) -> (i32, i32) {
    %c0_i32 = arith.constant 0 : i32
    %c0_i32_0 = arith.constant 0 : i32
    %c0_i32_1 = arith.constant 0 : i32
    return %c0_i32, %c0_i32_0 : i32, i32
  }
  func.func @transform_6(%arg0: i32, %arg1: i32, %arg2: memref<1xi32, #tpu.memory_space<smem>>, %arg3: memref<1xi32, #tpu.memory_space<smem>>) -> (i32, i32) {
    %c0_i32 = arith.constant 0 : i32
    %c0_i32_0 = arith.constant 0 : i32
    %c0_i32_1 = arith.constant 0 : i32
    return %c0_i32, %c0_i32_0 : i32, i32
  }
  func.func @transform_7(%arg0: i32, %arg1: i32, %arg2: memref<1xi32, #tpu.memory_space<smem>>, %arg3: memref<1xi32, #tpu.memory_space<smem>>) -> (i32, i32) {
    %c0_i32 = arith.constant 0 : i32
    %c0_i32_0 = arith.constant 0 : i32
    return %arg0, %c0_i32 : i32, i32
  }
}

</mosaic_0001>

<llo_original>
// kernel: predictor_forward_gin.2
$region0: #{predictor_forward_gin.2}
  #allocation0 [shape = 'u32[]', space=smem, size = 0x4, offset = 0x4, fixed_abs, tag = 'smem constant byte address 0x4 - core index']
  #allocation1 [shape = 'u32[144,128]{1,0:T(1,128)}', space=vmem, size = 0x12000, scoped, tag = 'internal scratch']
  #allocation2 [shape = 'f32[1]{0:T(128)S(6)}', space=smem, size = 0x200, scoped, tag = 'scoped memory for predictor_forward_gin.2']
  %s0 = inlined_call_operand.<no memory space> [shape: f32[1], index: 0, kind: input, shape index: {}]
  %s1 = inlined_call_operand.vmem [shape: bf16[128,128], index: 1, kind: input, shape index: {}]
  %s2 = inlined_call_operand.vmem [shape: bf16[128,128], index: 2, kind: input, shape index: {}]
  %s3 = inlined_call_operand.vmem [shape: bf16[128,128], index: 3, kind: output, shape index: {}]
  %s4 = sld [smem:[#allocation0]]
  $region22: #{predictor_forward_gin.2} parent=0
    _
  %s6 = ssub.s32 1, %s4
  %s7 = scalar_select 0, %s6, %s4
  %8 = sst [smem:[#allocation2]] %s0
  // Predicated region
  $region2: #{predictor_forward_gin.2} parent=0 // pred_check
    _
  $region3: #{predictor_forward_gin.2} parent=0 // pred_check_branch
    %10 = sbr.rel (0) target = $region5
  $region4: #{predictor_forward_gin.2} parent=0 // pred_region
    _
  $region5: #{predictor_forward_gin.2} parent=0 // pred_fallthru
    _
  // Predicated region
  $region6: #{predictor_forward_gin.2} parent=0 // pred_check
    _
  $region7: #{predictor_forward_gin.2} parent=0 // pred_check_branch
    %12 = sbr.rel (0) target = $region9
  $region8: #{predictor_forward_gin.2} parent=0 // pred_region
    _
  $region9: #{predictor_forward_gin.2} parent=0 // pred_fallthru
    _
  // Predicated region
  $region10: #{predictor_forward_gin.2} parent=0 // pred_check
    _
  $region11: #{predictor_forward_gin.2} parent=0 // pred_check_branch
    %14 = sbr.rel (0) target = $region13
  $region12: #{predictor_forward_gin.2} parent=0 // pred_region
    _
  $region13: #{predictor_forward_gin.2} parent=0 // pred_fallthru
    _
  %s16 = sld [smem:[#allocation2]]
  %v17 = vld [vmem:[%s1] sm:$0xf]
  %v18 = vld [vmem:[%s1 + $0x4] sm:$0xf]
  %v19 = vld [vmem:[%s1 + $0x8] sm:$0xf]
  %v20 = vld [vmem:[%s1 + $0xc] sm:$0xf]
  %v21 = vld [vmem:[%s1 + $0x10] sm:$0xf]
  %v22 = vld [vmem:[%s1 + $0x14] sm:$0xf]
  %v23 = vld [vmem:[%s1 + $0x18] sm:$0xf]
  %v24 = vld [vmem:[%s1 + $0x1c] sm:$0xf]
  %v25 = vld [vmem:[%s1 + $0x20] sm:$0xf]
  %v26 = vld [vmem:[%s1 + $0x24] sm:$0xf]
  %v27 = vld [vmem:[%s1 + $0x28] sm:$0xf]
  %v28 = vld [vmem:[%s1 + $0x2c] sm:$0xf]
  %v29 = vld [vmem:[%s1 + $0x30] sm:$0xf]
  %v30 = vld [vmem:[%s1 + $0x34] sm:$0xf]
  %v31 = vld [vmem:[%s1 + $0x38] sm:$0xf]
  %v32 = vld [vmem:[%s1 + $0x3c] sm:$0xf]
  %v33 = vunpack.c.l.bf16 %v17
  %v34 = vunpack.c.l.bf16 %v18
  %v35 = vunpack.c.l.bf16 %v19
  %v36 = vunpack.c.l.bf16 %v20
  %v37 = vunpack.c.l.bf16 %v21
  %v38 = vunpack.c.l.bf16 %v22
  %v39 = vunpack.c.l.bf16 %v23
  %v40 = vunpack.c.l.bf16 %v24
  %v41 = vunpack.c.l.bf16 %v25
  %v42 = vunpack.c.l.bf16 %v26
  %v43 = vunpack.c.l.bf16 %v27
  %v44 = vunpack.c.l.bf16 %v28
  %v45 = vunpack.c.l.bf16 %v29
  %v46 = vunpack.c.l.bf16 %v30
  %v47 = vunpack.c.l.bf16 %v31
  %v48 = vunpack.c.l.bf16 %v32
  %vm49 = vcmp.ge.f32.partialorder %v33, 0.0
  %vm50 = vcmp.ge.f32.partialorder %v34, 0.0
  %vm51 = vcmp.ge.f32.partialorder %v35, 0.0
  %vm52 = vcmp.ge.f32.partialorder %v36, 0.0
  %vm53 = vcmp.ge.f32.partialorder %v37, 0.0
  %vm54 = vcmp.ge.f32.partialorder %v38, 0.0
  %vm55 = vcmp.ge.f32.partialorder %v39, 0.0
  %vm56 = vcmp.ge.f32.partialorder %v40, 0.0
  %vm57 = vcmp.ge.f32.partialorder %v41, 0.0
  %vm58 = vcmp.ge.f32.partialorder %v42, 0.0
  %vm59 = vcmp.ge.f32.partialorder %v43, 0.0
  %vm60 = vcmp.ge.f32.partialorder %v44, 0.0
  %vm61 = vcmp.ge.f32.partialorder %v45, 0.0
  %vm62 = vcmp.ge.f32.partialorder %v46, 0.0
  %vm63 = vcmp.ge.f32.partialorder %v47, 0.0
  %vm64 = vcmp.ge.f32.partialorder %v48, 0.0
  %v65 = vstv %s16
  %v66 = vmul.f32 %v65, %v33
  %v67 = vmul.f32 %v65, %v34
  %v68 = vmul.f32 %v65, %v35
  %v69 = vmul.f32 %v65, %v36
  %v70 = vmul.f32 %v65, %v37
  %v71 = vmul.f32 %v65, %v38
  %v72 = vmul.f32 %v65, %v39
  %v73 = vmul.f32 %v65, %v40
  %v74 = vmul.f32 %v65, %v41
  %v75 = vmul.f32 %v65, %v42
  %v76 = vmul.f32 %v65, %v43
  %v77 = vmul.f32 %v65, %v44
  %v78 = vmul.f32 %v65, %v45
  %v79 = vmul.f32 %v65, %v46
  %v80 = vmul.f32 %v65, %v47
  %v81 = vmul.f32 %v65, %v48
  %v82 = vsel %vm49, %v33, %v66
  %v83 = vsel %vm50, %v34, %v67
  %v84 = vsel %vm51, %v35, %v68
  %v85 = vsel %vm52, %v36, %v69
  %v86 = vsel %vm53, %v37, %v70
  %v87 = vsel %vm54, %v38, %v71
  %v88 = vsel %vm55, %v39, %v72
  %v89 = vsel %vm56, %v40, %v73
  %v90 = vsel %vm57, %v41, %v74
  %v91 = vsel %vm58, %v42, %v75
  %v92 = vsel %vm59, %v43, %v76
  %v93 = vsel %vm60, %v44, %v77
  %v94 = vsel %vm61, %v45, %v78
  %v95 = vsel %vm62, %v46, %v79
  %v96 = vsel %vm63, %v47, %v80
  %v97 = vsel %vm64, %v48, %v81
  %v98 = vpack.c.bf16 %v83, %v82
  %v99 = vpack.c.bf16 %v85, %v84
  %v100 = vpack.c.bf16 %v87, %v86
  %v101 = vpack.c.bf16 %v89, %v88
  %v102 = vpack.c.bf16 %v91, %v90
  %v103 = vpack.c.bf16 %v93, %v92
  %v104 = vpack.c.bf16 %v95, %v94
  %v105 = vpack.c.bf16 %v97, %v96
  %v106 = vld [vmem:[%s2] sm:$0xf]
  %v107 = vld [vmem:[%s2 + $0x4] sm:$0xf]
  %v108 = vld [vmem:[%s2 + $0x8] sm:$0xf]
  %v109 = vld [vmem:[%s2 + $0xc] sm:$0xf]
  %v110 = vld [vmem:[%s2 + $0x10] sm:$0xf]
  %v111 = vld [vmem:[%s2 + $0x14] sm:$0xf]
  %v112 = vld [vmem:[%s2 + $0x18] sm:$0xf]
  %v113 = vld [vmem:[%s2 + $0x1c] sm:$0xf]
  %v114 = vld [vmem:[%s2 + $0x20] sm:$0xf]
  %v115 = vld [vmem:[%s2 + $0x24] sm:$0xf]
  %v116 = vld [vmem:[%s2 + $0x28] sm:$0xf]
  %v117 = vld [vmem:[%s2 + $0x2c] sm:$0xf]
  %v118 = vld [vmem:[%s2 + $0x30] sm:$0xf]
  %v119 = vld [vmem:[%s2 + $0x34] sm:$0xf]
  %v120 = vld [vmem:[%s2 + $0x38] sm:$0xf]
  %v121 = vld [vmem:[%s2 + $0x3c] sm:$0xf]
  %v138 = vunpack.c.l.b16 %v106
  %v139 = vunpack.c.l.b16 %v107
  %v140 = vunpack.c.l.b16 %v108
  %v141 = vunpack.c.l.b16 %v109
  %v142 = vunpack.c.l.b16 %v110
  %v143 = vunpack.c.l.b16 %v111
  %v144 = vunpack.c.l.b16 %v112
  %v145 = vunpack.c.l.b16 %v113
  %v146 = vunpack.c.l.b16 %v114
  %v147 = vunpack.c.l.b16 %v115
  %v148 = vunpack.c.l.b16 %v116
  %v149 = vunpack.c.l.b16 %v117
  %v150 = vunpack.c.l.b16 %v118
  %v151 = vunpack.c.l.b16 %v119
  %v152 = vunpack.c.l.b16 %v120
  %v153 = vunpack.c.l.b16 %v121
  %v154 = vpack.c.b16 %v139, %v138
  %v155 = vpack.c.b16 %v141, %v140
  %v156 = vpack.c.b16 %v143, %v142
  %v157 = vpack.c.b16 %v145, %v144
  %v158 = vpack.c.b16 %v147, %v146
  %v159 = vpack.c.b16 %v149, %v148
  %v160 = vpack.c.b16 %v151, %v150
  %v161 = vpack.c.b16 %v153, %v152
  %170 = vmatprep.subr.bf16.mxu0 0
  %171 = vmatpush1.bf16.msra.mxu0 %v154
  %172 = vmatprep.subr.bf16.mxu0 0
  %173 = vmatpush1.bf16.msra.mxu0 %v155
  %174 = vmatprep.subr.bf16.mxu0 0
  %175 = vmatpush1.bf16.msra.mxu0 %v156
  %176 = vmatprep.subr.bf16.mxu0 0
  %177 = vmatpush1.bf16.msra.mxu0 %v157
  %178 = vmatprep.subr.bf16.mxu0 0
  %179 = vmatpush1.bf16.msra.mxu0 %v158
  %180 = vmatprep.subr.bf16.mxu0 0
  %181 = vmatpush1.bf16.msra.mxu0 %v159
  %182 = vmatprep.subr.bf16.mxu0 0
  %183 = vmatpush1.bf16.msra.mxu0 %v160
  %184 = vmatprep.subr.bf16.mxu0 0
  %185 = vmatpush1.bf16.msra.mxu0 %v161
  %186 = vmatprep.subr.bf16.mxu0 0
  %187 = vmatpush1.bf16.msra.mxu0 0
  %188 = vmatprep.subr.bf16.mxu0 0
  %189 = vmatpush1.bf16.msra.mxu0 0
  %190 = vmatprep.subr.bf16.mxu0 0
  %191 = vmatpush1.bf16.msra.mxu0 0
  %192 = vmatprep.subr.bf16.mxu0 0
  %193 = vmatpush1.bf16.msra.mxu0 0
  %194 = vmatprep.subr.bf16.mxu0 0
  %195 = vmatpush1.bf16.msra.mxu0 0
  %196 = vmatprep.subr.bf16.mxu0 0
  %197 = vmatpush1.bf16.msra.mxu0 0
  %198 = vmatprep.subr.bf16.mxu0 0
  %199 = vmatpush1.bf16.msra.mxu0 0
  %200 = vmatprep.subr.bf16.mxu0 0
  %201 = vmatpush1.bf16.msra.mxu0 0
  %202 = vmatprep.mubr.bf16.mxu0 0
  %203 = vmatmul.mubr.bf16.gmra.mrb[0].mxu0 %v98
  %v204 = vpop.f32.mrb[0].mxu0
  %v205 = vadd.f32 0.0, %v204
  %v206 = vpop.f32.mrb[0].mxu0
  %v207 = vpop.f32.mrb[0].mxu0
  %v208 = vadd.f32 0.0, %v207
  %v209 = vpop.f32.mrb[0].mxu0
  %210 = vmatprep.mubr.bf16.mxu0 0
  %211 = vmatmul.mubr.bf16.gmra.mrb[0].mxu0 %v99
  %v212 = vpop.f32.mrb[0].mxu0
  %v213 = vadd.f32 0.0, %v212
  %v214 = vpop.f32.mrb[0].mxu0
  %v215 = vpop.f32.mrb[0].mxu0
  %v216 = vadd.f32 0.0, %v215
  %v217 = vpop.f32.mrb[0].mxu0
  %218 = vmatprep.mubr.bf16.mxu0 0
  %219 = vmatmul.mubr.bf16.gmra.mrb[0].mxu0 %v100
  %v220 = vpop.f32.mrb[0].mxu0
  %v221 = vadd.f32 0.0, %v220
  %v222 = vpop.f32.mrb[0].mxu0
  %v223 = vpop.f32.mrb[0].mxu0
  %v224 = vadd.f32 0.0, %v223
  %v225 = vpop.f32.mrb[0].mxu0
  %226 = vmatprep.mubr.bf16.mxu0 0
  %227 = vmatmul.mubr.bf16.gmra.mrb[0].mxu0 %v101
  %v228 = vpop.f32.mrb[0].mxu0
  %v229 = vadd.f32 0.0, %v228
  %v230 = vpop.f32.mrb[0].mxu0
  %v231 = vpop.f32.mrb[0].mxu0
  %v232 = vadd.f32 0.0, %v231
  %v233 = vpop.f32.mrb[0].mxu0
  %234 = vmatprep.mubr.bf16.mxu0 0
  %235 = vmatmul.mubr.bf16.gmra.mrb[0].mxu0 %v102
  %v236 = vpop.f32.mrb[0].mxu0
  %v237 = vadd.f32 0.0, %v236
  %v238 = vpop.f32.mrb[0].mxu0
  %v239 = vpop.f32.mrb[0].mxu0
  %v240 = vadd.f32 0.0, %v239
  %v241 = vpop.f32.mrb[0].mxu0
  %242 = vmatprep.mubr.bf16.mxu0 0
  %243 = vmatmul.mubr.bf16.gmra.mrb[0].mxu0 %v103
  %v244 = vpop.f32.mrb[0].mxu0
  %v245 = vadd.f32 0.0, %v244
  %v246 = vpop.f32.mrb[0].mxu0
  %v247 = vpop.f32.mrb[0].mxu0
  %v248 = vadd.f32 0.0, %v247
  %v249 = vpop.f32.mrb[0].mxu0
  %250 = vmatprep.mubr.bf16.mxu0 0
  %251 = vmatmul.mubr.bf16.gmra.mrb[0].mxu0 %v104
  %v252 = vpop.f32.mrb[0].mxu0
  %v253 = vadd.f32 0.0, %v252
  %v254 = vpop.f32.mrb[0].mxu0
  %v255 = vpop.f32.mrb[0].mxu0
  %v256 = vadd.f32 0.0, %v255
  %v257 = vpop.f32.mrb[0].mxu0
  %258 = vmatprep.mubr.bf16.mxu0 0
  %259 = vmatmul.mubr.bf16.gmra.mrb[0].mxu0 %v105
  %v260 = vpop.f32.mrb[0].mxu0
  %v261 = vadd.f32 0.0, %v260
  %v262 = vpop.f32.mrb[0].mxu0
  %v263 = vpop.f32.mrb[0].mxu0
  %v264 = vadd.f32 0.0, %v263
  %v265 = vpop.f32.mrb[0].mxu0
  %266 = vdwg.mxu0
  %v267 = vpack.c.bf16 %v208, %v205
  %v268 = vpack.c.bf16 %v216, %v213
  %v269 = vpack.c.bf16 %v224, %v221
  %v270 = vpack.c.bf16 %v232, %v229
  %v271 = vpack.c.bf16 %v240, %v237
  %v272 = vpack.c.bf16 %v248, %v245
  %v273 = vpack.c.bf16 %v256, %v253
  %v274 = vpack.c.bf16 %v264, %v261
  %v283 = vunpack.c.l.b16 %v267
  %v284 = vunpack.c.h.b16 %v267
  %v285 = vunpack.c.l.b16 %v268
  %v286 = vunpack.c.h.b16 %v268
  %v287 = vunpack.c.l.b16 %v269
  %v288 = vunpack.c.h.b16 %v269
  %v289 = vunpack.c.l.b16 %v270
  %v290 = vunpack.c.h.b16 %v270
  %v291 = vunpack.c.l.b16 %v271
  %v292 = vunpack.c.h.b16 %v271
  %v293 = vunpack.c.l.b16 %v272
  %v294 = vunpack.c.h.b16 %v272
  %v295 = vunpack.c.l.b16 %v273
  %v296 = vunpack.c.h.b16 %v273
  %v297 = vunpack.c.l.b16 %v274
  %v298 = vunpack.c.h.b16 %v274
  %v299 = vpack.c.b16 %v283, %v283
  %v300 = vpack.c.b16 %v284, %v284
  %v301 = vpack.c.b16 %v285, %v285
  %v302 = vpack.c.b16 %v286, %v286
  %v303 = vpack.c.b16 %v287, %v287
  %v304 = vpack.c.b16 %v288, %v288
  %v305 = vpack.c.b16 %v289, %v289
  %v306 = vpack.c.b16 %v290, %v290
  %v307 = vpack.c.b16 %v291, %v291
  %v308 = vpack.c.b16 %v292, %v292
  %v309 = vpack.c.b16 %v293, %v293
  %v310 = vpack.c.b16 %v294, %v294
  %v311 = vpack.c.b16 %v295, %v295
  %v312 = vpack.c.b16 %v296, %v296
  %v313 = vpack.c.b16 %v297, %v297
  %v314 = vpack.c.b16 %v298, %v298
  %331 = vst [vmem:[%s3] sm:$0xf] %v299
  %332 = vst [vmem:[%s3 + $0x4] sm:$0xf] %v300
  %333 = vst [vmem:[%s3 + $0x8] sm:$0xf] %v301
  %334 = vst [vmem:[%s3 + $0xc] sm:$0xf] %v302
  %335 = vst [vmem:[%s3 + $0x10] sm:$0xf] %v303
  %336 = vst [vmem:[%s3 + $0x14] sm:$0xf] %v304
  %337 = vst [vmem:[%s3 + $0x18] sm:$0xf] %v305
  %338 = vst [vmem:[%s3 + $0x1c] sm:$0xf] %v306
  %339 = vst [vmem:[%s3 + $0x20] sm:$0xf] %v307
  %340 = vst [vmem:[%s3 + $0x24] sm:$0xf] %v308
  %341 = vst [vmem:[%s3 + $0x28] sm:$0xf] %v309
  %342 = vst [vmem:[%s3 + $0x2c] sm:$0xf] %v310
  %343 = vst [vmem:[%s3 + $0x30] sm:$0xf] %v311
  %344 = vst [vmem:[%s3 + $0x34] sm:$0xf] %v312
  %345 = vst [vmem:[%s3 + $0x38] sm:$0xf] %v313
  %346 = vst [vmem:[%s3 + $0x3c] sm:$0xf] %v314
  // Predicated region
  $region14: #{predictor_forward_gin.2} parent=0 // pred_check
    _
  $region15: #{predictor_forward_gin.2} parent=0 // pred_check_branch
    %348 = sbr.rel (0) target = $region17
  $region16: #{predictor_forward_gin.2} parent=0 // pred_region
    _
  $region17: #{predictor_forward_gin.2} parent=0 // pred_fallthru
    _
  // Predicated region
  $region18: #{predictor_forward_gin.2} parent=0 // pred_check
    _
  $region19: #{predictor_forward_gin.2} parent=0 // pred_check_branch
    %350 = sbr.rel (0) target = $region21
  $region20: #{predictor_forward_gin.2} parent=0 // pred_region
    _
  $region21: #{predictor_forward_gin.2} parent=0 // pred_fallthru
    _

// kernel: predictor_forward_gin.3
$region0: #{predictor_forward_gin.3}
  #allocation0 [shape = 'u32[]', space=smem, size = 0x4, offset = 0x4, fixed_abs, tag = 'smem constant byte address 0x4 - core index']
  #allocation1 [shape = 'u32[144,128]{1,0:T(1,128)}', space=vmem, size = 0x12000, scoped, tag = 'internal scratch']
  #allocation2 [shape = 'f32[128,128]{1,0:T(8,128)}', space=vmem, size = 0x10000, scoped, tag = 'scratch operand']
  #allocation3 [shape = 's32[1]{0}', space=sflag, size = 0x4, scoped, tag = 'scoped memory for predictor_forward_gin.3']
  #allocation4 [shape = 's32[1]{0:T(128)S(6)}', space=smem, size = 0x200, scoped, tag = 'prefetched SMEM operand 0']
  #allocation5 [shape = 's32[1]{0:T(128)S(6)}', space=smem, size = 0x200, scoped, tag = 'prefetched SMEM operand 1']
  %s0 = inlined_call_operand.<no memory space> [shape: s32[1], index: 0, kind: input, shape index: {}]
  %s1 = inlined_call_operand.<no memory space> [shape: s32[1], index: 1, kind: input, shape index: {}]
  %s2 = inlined_call_operand.vmem [shape: bf16[128,128], index: 2, kind: input, shape index: {}]
  %s3 = inlined_call_operand.vmem [shape: bf16[128,128], index: 3, kind: input, shape index: {}]
  %s4 = inlined_call_operand.vmem [shape: f32[128,128], index: 4, kind: input, shape index: {}]
  %s5 = inlined_call_operand.vmem [shape: bf16[128,128], index: 5, kind: input, shape index: {}]
  %s6 = inlined_call_operand.vmem [shape: f32[1,128], index: 6, kind: input, shape index: {}]
  %s7 = inlined_call_operand.vmem [shape: bf16[128,128], index: 7, kind: input, shape index: {}]
  %s8 = inlined_call_operand.vmem [shape: f32[1,128], index: 8, kind: input, shape index: {}]
  %s9 = inlined_call_operand.vmem [shape: f32[128,128], index: 9, kind: output, shape index: {}]
  %s10 = sld [smem:[#allocation0]]
  $region50: #{predictor_forward_gin.3} parent=0
    _
  %s12 = ssub.s32 1, %s10
  %s13 = scalar_select 0, %s12, %s10
  %14 = sst [smem:[#allocation4]] %s0
  %15 = sst [smem:[#allocation5]] %s1
  // Predicated region
  $region2: #{predictor_forward_gin.3} parent=0 // pred_check
    _
  $region3: #{predictor_forward_gin.3} parent=0 // pred_check_branch
    %17 = sbr.rel (0) target = $region5
  $region4: #{predictor_forward_gin.3} parent=0 // pred_region
    %s18 = sadd.s32 0, 0
    %s19 = sld [smem:[#allocation4 + %s18]]
    %p20 = scmp.lt.s32.totalorder %s19, 0
    %s21 = scalar_select %p20, %s19, 0
    %s22 = smul.addr %s21, 4
    %s23 = scalar_lea.vmem %s2, %s22
    %s24 = sadd.s32 0, 0
    %s25 = sld [smem:[#allocation4 + %s24]]
  $region5: #{predictor_forward_gin.3} parent=0 // pred_fallthru
    _
  // Predicated region
  $region6: #{predictor_forward_gin.3} parent=0 // pred_check
    _
  $region7: #{predictor_forward_gin.3} parent=0 // pred_check_branch
    %27 = sbr.rel (0) target = $region9
  $region8: #{predictor_forward_gin.3} parent=0 // pred_region
    _
  $region9: #{predictor_forward_gin.3} parent=0 // pred_fallthru
    _
  // Predicated region
  $region10: #{predictor_forward_gin.3} parent=0 // pred_check
    _
  $region11: #{predictor_forward_gin.3} parent=0 // pred_check_branch
    %29 = sbr.rel (0) target = $region13
  $region12: #{predictor_forward_gin.3} parent=0 // pred_region
    _
  $region13: #{predictor_forward_gin.3} parent=0 // pred_fallthru
    _
  // Predicated region
  $region14: #{predictor_forward_gin.3} parent=0 // pred_check
    _
  $region15: #{predictor_forward_gin.3} parent=0 // pred_check_branch
    %31 = sbr.rel (0) target = $region17
  $region16: #{predictor_forward_gin.3} parent=0 // pred_region
    _
  $region17: #{predictor_forward_gin.3} parent=0 // pred_fallthru
    _
  // Predicated region
  $region18: #{predictor_forward_gin.3} parent=0 // pred_check
    _
  $region19: #{predictor_forward_gin.3} parent=0 // pred_check_branch
    %33 = sbr.rel (0) target = $region21
  $region20: #{predictor_forward_gin.3} parent=0 // pred_region
    _
  $region21: #{predictor_forward_gin.3} parent=0 // pred_fallthru
    _
  // Predicated region
  $region22: #{predictor_forward_gin.3} parent=0 // pred_check
    _
  $region23: #{predictor_forward_gin.3} parent=0 // pred_check_branch
    %35 = sbr.rel (0) target = $region25
  $region24: #{predictor_forward_gin.3} parent=0 // pred_region
    _
  $region25: #{predictor_forward_gin.3} parent=0 // pred_fallthru
    _
  // Predicated region
  $region26: #{predictor_forward_gin.3} parent=0 // pred_check
    _
  $region27: #{predictor_forward_gin.3} parent=0 // pred_check_branch
    %37 = sbr.rel (0) target = $region29
  $region28: #{predictor_forward_gin.3} parent=0 // pred_region
    _
  $region29: #{predictor_forward_gin.3} parent=0 // pred_fallthru
    _
  %s38 = sadd.s32 0, 0
  %s39 = sld [smem:[#allocation4 + %s38]]
  %p40 = scmp.lt.s32.totalorder %s39, 0
  %s41 = scalar_select %p40, %s39, 0
  %s42 = smul.addr %s41, 4
  %s43 = scalar_lea.vmem %s2, %s42
  %s44 = sadd.s32 0, 0
  %s45 = sld [smem:[#allocation4 + %s44]]
  %p46 = scmp.lt.s32.totalorder %s45, 0
  %s47 = scalar_select %p46, %s45, 0
  %s48 = smul.addr %s47, 4
  %s49 = scalar_lea.vmem %s2, %s48
  %s50 = sadd.s32 0, 0
  %s51 = sld [smem:[#allocation4 + %s50]]
  %p53 = scmp.eq.s32.totalorder 0, 0
  // Predicated region
  $region30: #{predictor_forward_gin.3} parent=0 // pred_check
    %p54 = pneg %p53
  $region31: #{predictor_forward_gin.3} parent=0 // pred_check_branch
    %56 = sbr.rel (%p54) target = $region33
  $region32: #{predictor_forward_gin.3} parent=0 // pred_region
    %v57 = vld [vmem:[%s4] sm:$0xff]
    %v58 = vld [vmem:[%s4 + $0x8] sm:$0xff]
    %v59 = vld [vmem:[%s4 + $0x10] sm:$0xff]
    %v60 = vld [vmem:[%s4 + $0x18] sm:$0xff]
    %v61 = vld [vmem:[%s4 + $0x20] sm:$0xff]
    %v62 = vld [vmem:[%s4 + $0x28] sm:$0xff]
    %v63 = vld [vmem:[%s4 + $0x30] sm:$0xff]
    %v64 = vld [vmem:[%s4 + $0x38] sm:$0xff]
    %v65 = vld [vmem:[%s4 + $0x40] sm:$0xff]
    %v66 = vld [vmem:[%s4 + $0x48] sm:$0xff]
    %v67 = vld [vmem:[%s4 + $0x50] sm:$0xff]
    %v68 = vld [vmem:[%s4 + $0x58] sm:$0xff]
    %v69 = vld [vmem:[%s4 + $0x60] sm:$0xff]
    %v70 = vld [vmem:[%s4 + $0x68] sm:$0xff]
    %v71 = vld [vmem:[%s4 + $0x70] sm:$0xff]
    %v72 = vld [vmem:[%s4 + $0x78] sm:$0xff]
    %73 = vst [vmem:[#allocation2] sm:$0xff] %v57
    %74 = vst [vmem:[#allocation2 + $0x8] sm:$0xff] %v58
    %75 = vst [vmem:[#allocation2 + $0x10] sm:$0xff] %v59
    %76 = vst [vmem:[#allocation2 + $0x18] sm:$0xff] %v60
    %77 = vst [vmem:[#allocation2 + $0x20] sm:$0xff] %v61
    %78 = vst [vmem:[#allocation2 + $0x28] sm:$0xff] %v62
    %79 = vst [vmem:[#allocation2 + $0x30] sm:$0xff] %v63
    %80 = vst [vmem:[#allocation2 + $0x38] sm:$0xff] %v64
    %81 = vst [vmem:[#allocation2 + $0x40] sm:$0xff] %v65
    %82 = vst [vmem:[#allocation2 + $0x48] sm:$0xff] %v66
    %83 = vst [vmem:[#allocation2 + $0x50] sm:$0xff] %v67
    %84 = vst [vmem:[#allocation2 + $0x58] sm:$0xff] %v68
    %85 = vst [vmem:[#allocation2 + $0x60] sm:$0xff] %v69
    %86 = vst [vmem:[#allocation2 + $0x68] sm:$0xff] %v70
    %87 = vst [vmem:[#allocation2 + $0x70] sm:$0xff] %v71
    %88 = vst [vmem:[#allocation2 + $0x78] sm:$0xff] %v72
  $region33: #{predictor_forward_gin.3} parent=0 // pred_fallthru
    _
  %s89 = sld [smem:[#allocation5]]
  %p90 = scmp.lt.s32.totalorder 0, %s89
  // Predicated region
  $region34: #{predictor_forward_gin.3} parent=0 // pred_check
    %p91 = pneg %p90
  $region35: #{predictor_forward_gin.3} parent=0 // pred_check_branch
    %93 = sbr.rel (%p91) target = $region37
  $region36: #{predictor_forward_gin.3} parent=0 // pred_region
    %s94 = sadd.s32 0, 0
    %s95 = sld [smem:[#allocation4 + %s94]]
    %s96 = smul.u32 %s95, 128
    %s97 = sshra.s32 %s96, 3
    %s98 = sand.u32 %s96, 7
    %s99 = smul.addr %s97, 4
    %s100 = scalar_lea.vmem %s3, %s99
    %v101 = vld [vmem:[%s100] sm:$0xf]
    %v102 = vld [vmem:[%s100 + $0x4] sm:$0xf]
    %v103 = vld [vmem:[%s100 + $0x8] sm:$0xf]
    %v104 = vld [vmem:[%s100 + $0xc] sm:$0xf]
    %v105 = vld [vmem:[%s100 + $0x10] sm:$0xf]
    %v106 = vld [vmem:[%s100 + $0x14] sm:$0xf]
    %v107 = vld [vmem:[%s100 + $0x18] sm:$0xf]
    %v108 = vld [vmem:[%s100 + $0x1c] sm:$0xf]
    %v109 = vld [vmem:[%s100 + $0x20] sm:$0xf]
    %v110 = vld [vmem:[%s100 + $0x24] sm:$0xf]
    %v111 = vld [vmem:[%s100 + $0x28] sm:$0xf]
    %v112 = vld [vmem:[%s100 + $0x2c] sm:$0xf]
    %v113 = vld [vmem:[%s100 + $0x30] sm:$0xf]
    %v114 = vld [vmem:[%s100 + $0x34] sm:$0xf]
    %v115 = vld [vmem:[%s100 + $0x38] sm:$0xf]
    %v116 = vld [vmem:[%s100 + $0x3c] sm:$0xf]
    %v117 = vld [vmem:[#allocation2] sm:$0xff]
    %v118 = vld [vmem:[#allocation2 + $0x8] sm:$0xff]
    %v119 = vld [vmem:[#allocation2 + $0x10] sm:$0xff]
    %v120 = vld [vmem:[#allocation2 + $0x18] sm:$0xff]
    %v121 = vld [vmem:[#allocation2 + $0x20] sm:$0xff]
    %v122 = vld [vmem:[#allocation2 + $0x28] sm:$0xff]
    %v123 = vld [vmem:[#allocation2 + $0x30] sm:$0xff]
    %v124 = vld [vmem:[#allocation2 + $0x38] sm:$0xff]
    %v125 = vld [vmem:[#allocation2 + $0x40] sm:$0xff]
    %v126 = vld [vmem:[#allocation2 + $0x48] sm:$0xff]
    %v127 = vld [vmem:[#allocation2 + $0x50] sm:$0xff]
    %v128 = vld [vmem:[#allocation2 + $0x58] sm:$0xff]
    %v129 = vld [vmem:[#allocation2 + $0x60] sm:$0xff]
    %v130 = vld [vmem:[#allocation2 + $0x68] sm:$0xff]
    %v131 = vld [vmem:[#allocation2 + $0x70] sm:$0xff]
    %v132 = vld [vmem:[#allocation2 + $0x78] sm:$0xff]
    %v133 = vld [vmem:[%s49] sm:$0xf]
    %v134 = vld [vmem:[%s49 + $0x4] sm:$0xf]
    %v135 = vld [vmem:[%s49 + $0x8] sm:$0xf]
    %v136 = vld [vmem:[%s49 + $0xc] sm:$0xf]
    %v137 = vld [vmem:[%s49 + $0x10] sm:$0xf]
    %v138 = vld [vmem:[%s49 + $0x14] sm:$0xf]
    %v139 = vld [vmem:[%s49 + $0x18] sm:$0xf]
    %v140 = vld [vmem:[%s49 + $0x1c] sm:$0xf]
    %v141 = vld [vmem:[%s49 + $0x20] sm:$0xf]
    %v142 = vld [vmem:[%s49 + $0x24] sm:$0xf]
    %v143 = vld [vmem:[%s49 + $0x28] sm:$0xf]
    %v144 = vld [vmem:[%s49 + $0x2c] sm:$0xf]
    %v145 = vld [vmem:[%s49 + $0x30] sm:$0xf]
    %v146 = vld [vmem:[%s49 + $0x34] sm:$0xf]
    %v147 = vld [vmem:[%s49 + $0x38] sm:$0xf]
    %v148 = vld [vmem:[%s49 + $0x3c] sm:$0xf]
    %v165 = vunpack.c.l.b16 %v133
    %v166 = vunpack.c.l.b16 %v134
    %v167 = vunpack.c.l.b16 %v135
    %v168 = vunpack.c.l.b16 %v136
    %v169 = vunpack.c.l.b16 %v137
    %v170 = vunpack.c.l.b16 %v138
    %v171 = vunpack.c.l.b16 %v139
    %v172 = vunpack.c.l.b16 %v140
    %v173 = vunpack.c.l.b16 %v141
    %v174 = vunpack.c.l.b16 %v142
    %v175 = vunpack.c.l.b16 %v143
    %v176 = vunpack.c.l.b16 %v144
    %v177 = vunpack.c.l.b16 %v145
    %v178 = vunpack.c.l.b16 %v146
    %v179 = vunpack.c.l.b16 %v147
    %v180 = vunpack.c.l.b16 %v148
    %v181 = vpack.c.b16 %v166, %v165
    %v182 = vpack.c.b16 %v168, %v167
    %v183 = vpack.c.b16 %v170, %v169
    %v184 = vpack.c.b16 %v172, %v171
    %v185 = vpack.c.b16 %v174, %v173
    %v186 = vpack.c.b16 %v176, %v175
    %v187 = vpack.c.b16 %v178, %v177
    %v188 = vpack.c.b16 %v180, %v179
    %v213 = vunpack.c.l.b16 %v101
    %v214 = vunpack.c.l.b16 %v102
    %v215 = vunpack.c.l.b16 %v103
    %v216 = vunpack.c.l.b16 %v104
    %v217 = vunpack.c.l.b16 %v105
    %v218 = vunpack.c.l.b16 %v106
    %v219 = vunpack.c.l.b16 %v107
    %v220 = vunpack.c.l.b16 %v108
    %v221 = vunpack.c.l.b16 %v109
    %v222 = vunpack.c.l.b16 %v110
    %v223 = vunpack.c.l.b16 %v111
    %v224 = vunpack.c.l.b16 %v112
    %v225 = vunpack.c.l.b16 %v113
    %v226 = vunpack.c.l.b16 %v114
    %v227 = vunpack.c.l.b16 %v115
    %v228 = vunpack.c.l.b16 %v116
    %v229 = vpack.c.b16 %v214, %v213
    %v230 = vpack.c.b16 %v216, %v215
    %v231 = vpack.c.b16 %v218, %v217
    %v232 = vpack.c.b16 %v220, %v219
    %v233 = vpack.c.b16 %v222, %v221
    %v234 = vpack.c.b16 %v224, %v223
    %v235 = vpack.c.b16 %v226, %v225
    %v236 = vpack.c.b16 %v228, %v227
    %245 = vmatprep.subr.bf16.mxu0 0
    %246 = vmatpush1.bf16.msra.mxu0 %v229
    %247 = vmatprep.subr.bf16.mxu0 0
    %248 = vmatpush1.bf16.msra.mxu0 %v230
    %249 = vmatprep.subr.bf16.mxu0 0
    %250 = vmatpush1.bf16.msra.mxu0 %v231
    %251 = vmatprep.subr.bf16.mxu0 0
    %252 = vmatpush1.bf16.msra.mxu0 %v232
    %253 = vmatprep.subr.bf16.mxu0 0
    %254 = vmatpush1.bf16.msra.mxu0 %v233
    %255 = vmatprep.subr.bf16.mxu0 0
    %256 = vmatpush1.bf16.msra.mxu0 %v234
    %257 = vmatprep.subr.bf16.mxu0 0
    %258 = vmatpush1.bf16.msra.mxu0 %v235
    %259 = vmatprep.subr.bf16.mxu0 0
    %260 = vmatpush1.bf16.msra.mxu0 %v236
    %261 = vmatprep.subr.bf16.mxu0 0
    %262 = vmatpush1.bf16.msra.mxu0 0
    %263 = vmatprep.subr.bf16.mxu0 0
    %264 = vmatpush1.bf16.msra.mxu0 0
    %265 = vmatprep.subr.bf16.mxu0 0
    %266 = vmatpush1.bf16.msra.mxu0 0
    %267 = vmatprep.subr.bf16.mxu0 0
    %268 = vmatpush1.bf16.msra.mxu0 0
    %269 = vmatprep.subr.bf16.mxu0 0
    %270 = vmatpush1.bf16.msra.mxu0 0
    %271 = vmatprep.subr.bf16.mxu0 0
    %272 = vmatpush1.bf16.msra.mxu0 0
    %273 = vmatprep.subr.bf16.mxu0 0
    %274 = vmatpush1.bf16.msra.mxu0 0
    %275 = vmatprep.subr.bf16.mxu0 0
    %276 = vmatpush1.bf16.msra.mxu0 0
    %277 = vmatprep.mubr.bf16.mxu0 0
    %278 = vmatmul.mubr.bf16.gmra.mrb[0].mxu0 %v181
    %v279 = vpop.f32.mrb[0].mxu0
    %v280 = vadd.f32 0.0, %v279
    %v281 = vpop.f32.mrb[0].mxu0
    %v282 = vpop.f32.mrb[0].mxu0
    %v283 = vadd.f32 0.0, %v282
    %v284 = vpop.f32.mrb[0].mxu0
    %285 = vmatprep.mubr.bf16.mxu0 0
    %286 = vmatmul.mubr.bf16.gmra.mrb[0].mxu0 %v182
    %v287 = vpop.f32.mrb[0].mxu0
    %v288 = vadd.f32 0.0, %v287
    %v289 = vpop.f32.mrb[0].mxu0
    %v290 = vpop.f32.mrb[0].mxu0
    %v291 = vadd.f32 0.0, %v290
    %v292 = vpop.f32.mrb[0].mxu0
    %293 = vmatprep.mubr.bf16.mxu0 0
    %294 = vmatmul.mubr.bf16.gmra.mrb[0].mxu0 %v183
    %v295 = vpop.f32.mrb[0].mxu0
    %v296 = vadd.f32 0.0, %v295
    %v297 = vpop.f32.mrb[0].mxu0
    %v298 = vpop.f32.mrb[0].mxu0
    %v299 = vadd.f32 0.0, %v298
    %v300 = vpop.f32.mrb[0].mxu0
    %301 = vmatprep.mubr.bf16.mxu0 0
    %302 = vmatmul.mubr.bf16.gmra.mrb[0].mxu0 %v184
    %v303 = vpop.f32.mrb[0].mxu0
    %v304 = vadd.f32 0.0, %v303
    %v305 = vpop.f32.mrb[0].mxu0
    %v306 = vpop.f32.mrb[0].mxu0
    %v307 = vadd.f32 0.0, %v306
    %v308 = vpop.f32.mrb[0].mxu0
    %309 = vmatprep.mubr.bf16.mxu0 0
    %310 = vmatmul.mubr.bf16.gmra.mrb[0].mxu0 %v185
    %v311 = vpop.f32.mrb[0].mxu0
    %v312 = vadd.f32 0.0, %v311
    %v313 = vpop.f32.mrb[0].mxu0
    %v314 = vpop.f32.mrb[0].mxu0
    %v315 = vadd.f32 0.0, %v314
    %v316 = vpop.f32.mrb[0].mxu0
    %317 = vmatprep.mubr.bf16.mxu0 0
    %318 = vmatmul.mubr.bf16.gmra.mrb[0].mxu0 %v186
    %v319 = vpop.f32.mrb[0].mxu0
    %v320 = vadd.f32 0.0, %v319
    %v321 = vpop.f32.mrb[0].mxu0
    %v322 = vpop.f32.mrb[0].mxu0
    %v323 = vadd.f32 0.0, %v322
    %v324 = vpop.f32.mrb[0].mxu0
    %325 = vmatprep.mubr.bf16.mxu0 0
    %326 = vmatmul.mubr.bf16.gmra.mrb[0].mxu0 %v187
    %v327 = vpop.f32.mrb[0].mxu0
    %v328 = vadd.f32 0.0, %v327
    %v329 = vpop.f32.mrb[0].mxu0
    %v330 = vpop.f32.mrb[0].mxu0
    %v331 = vadd.f32 0.0, %v330
    %v332 = vpop.f32.mrb[0].mxu0
    %333 = vmatprep.mubr.bf16.mxu0 0
    %334 = vmatmul.mubr.bf16.gmra.mrb[0].mxu0 %v188
    %v335 = vpop.f32.mrb[0].mxu0
    %v336 = vadd.f32 0.0, %v335
    %v337 = vpop.f32.mrb[0].mxu0
    %v338 = vpop.f32.mrb[0].mxu0
    %v339 = vadd.f32 0.0, %v338
    %v340 = vpop.f32.mrb[0].mxu0
    %341 = vdwg.mxu0
    %v342 = vadd.f32 %v117, %v280
    %v343 = vadd.f32 %v118, %v283
    %v344 = vadd.f32 %v119, %v288
    %v345 = vadd.f32 %v120, %v291
    %v346 = vadd.f32 %v121, %v296
    %v347 = vadd.f32 %v122, %v299
    %v348 = vadd.f32 %v123, %v304
    %v349 = vadd.f32 %v124, %v307
    %v350 = vadd.f32 %v125, %v312
    %v351 = vadd.f32 %v126, %v315
    %v352 = vadd.f32 %v127, %v320
    %v353 = vadd.f32 %v128, %v323
    %v354 = vadd.f32 %v129, %v328
    %v355 = vadd.f32 %v130, %v331
    %v356 = vadd.f32 %v131, %v336
    %v357 = vadd.f32 %v132, %v339
    %358 = vst [vmem:[#allocation2] sm:$0xff] %v342
    %359 = vst [vmem:[#allocation2 + $0x8] sm:$0xff] %v343
    %360 = vst [vmem:[#allocation2 + $0x10] sm:$0xff] %v344
    %361 = vst [vmem:[#allocation2 + $0x18] sm:$0xff] %v345
    %362 = vst [vmem:[#allocation2 + $0x20] sm:$0xff] %v346
    %363 = vst [vmem:[#allocation2 + $0x28] sm:$0xff] %v347
    %364 = vst [vmem:[#allocation2 + $0x30] sm:$0xff] %v348
    %365 = vst [vmem:[#allocation2 + $0x38] sm:$0xff] %v349
    %366 = vst [vmem:[#allocation2 + $0x40] sm:$0xff] %v350
    %367 = vst [vmem:[#allocation2 + $0x48] sm:$0xff] %v351
    %368 = vst [vmem:[#allocation2 + $0x50] sm:$0xff] %v352
    %369 = vst [vmem:[#allocation2 + $0x58] sm:$0xff] %v353
    %370 = vst [vmem:[#allocation2 + $0x60] sm:$0xff] %v354
    %371 = vst [vmem:[#allocation2 + $0x68] sm:$0xff] %v355
    %372 = vst [vmem:[#allocation2 + $0x70] sm:$0xff] %v356
    %373 = vst [vmem:[#allocation2 + $0x78] sm:$0xff] %v357
  $region37: #{predictor_forward_gin.3} parent=0 // pred_fallthru
    _
  // Predicated region
  $region38: #{predictor_forward_gin.3} parent=0 // pred_check
    %p374 = pneg %p53
  $region39: #{predictor_forward_gin.3} parent=0 // pred_check_branch
    %376 = sbr.rel (%p374) target = $region41
  $region40: #{predictor_forward_gin.3} parent=0 // pred_region
    %v377 = vld [vmem:[#allocation2] sm:$0xff]
    %v378 = vld [vmem:[#allocation2 + $0x8] sm:$0xff]
    %v379 = vld [vmem:[#allocation2 + $0x10] sm:$0xff]
    %v380 = vld [vmem:[#allocation2 + $0x18] sm:$0xff]
    %v381 = vld [vmem:[#allocation2 + $0x20] sm:$0xff]
    %v382 = vld [vmem:[#allocation2 + $0x28] sm:$0xff]
    %v383 = vld [vmem:[#allocation2 + $0x30] sm:$0xff]
    %v384 = vld [vmem:[#allocation2 + $0x38] sm:$0xff]
    %v385 = vld [vmem:[#allocation2 + $0x40] sm:$0xff]
    %v386 = vld [vmem:[#allocation2 + $0x48] sm:$0xff]
    %v387 = vld [vmem:[#allocation2 + $0x50] sm:$0xff]
    %v388 = vld [vmem:[#allocation2 + $0x58] sm:$0xff]
    %v389 = vld [vmem:[#allocation2 + $0x60] sm:$0xff]
    %v390 = vld [vmem:[#allocation2 + $0x68] sm:$0xff]
    %v391 = vld [vmem:[#allocation2 + $0x70] sm:$0xff]
    %v392 = vld [vmem:[#allocation2 + $0x78] sm:$0xff]
    %v393 = vpack.c.bf16 %v378, %v377
    %v394 = vpack.c.bf16 %v380, %v379
    %v395 = vpack.c.bf16 %v382, %v381
    %v396 = vpack.c.bf16 %v384, %v383
    %v397 = vpack.c.bf16 %v386, %v385
    %v398 = vpack.c.bf16 %v388, %v387
    %v399 = vpack.c.bf16 %v390, %v389
    %v400 = vpack.c.bf16 %v392, %v391
    %v401 = vld [vmem:[%s5] sm:$0xf]
    %v402 = vld [vmem:[%s5 + $0x4] sm:$0xf]
    %v403 = vld [vmem:[%s5 + $0x8] sm:$0xf]
    %v404 = vld [vmem:[%s5 + $0xc] sm:$0xf]
    %v405 = vld [vmem:[%s5 + $0x10] sm:$0xf]
    %v406 = vld [vmem:[%s5 + $0x14] sm:$0xf]
    %v407 = vld [vmem:[%s5 + $0x18] sm:$0xf]
    %v408 = vld [vmem:[%s5 + $0x1c] sm:$0xf]
    %v409 = vld [vmem:[%s5 + $0x20] sm:$0xf]
    %v410 = vld [vmem:[%s5 + $0x24] sm:$0xf]
    %v411 = vld [vmem:[%s5 + $0x28] sm:$0xf]
    %v412 = vld [vmem:[%s5 + $0x2c] sm:$0xf]
    %v413 = vld [vmem:[%s5 + $0x30] sm:$0xf]
    %v414 = vld [vmem:[%s5 + $0x34] sm:$0xf]
    %v415 = vld [vmem:[%s5 + $0x38] sm:$0xf]
    %v416 = vld [vmem:[%s5 + $0x3c] sm:$0xf]
    %v417 = vld [vmem:[%s6] sm:$0x1]
    %v419 = vlaneseq
    %v420 = vshrl.u32 %v419, 7
    %v421 = vsub.s32 0, %v420
    %v422 = vrot.slane %v417, %v421
    %v440 = vunpack.c.l.b16 %v401
    %v441 = vunpack.c.l.b16 %v402
    %v442 = vunpack.c.l.b16 %v403
    %v443 = vunpack.c.l.b16 %v404
    %v444 = vunpack.c.l.b16 %v405
    %v445 = vunpack.c.l.b16 %v406
    %v446 = vunpack.c.l.b16 %v407
    %v447 = vunpack.c.l.b16 %v408
    %v448 = vunpack.c.l.b16 %v409
    %v449 = vunpack.c.l.b16 %v410
    %v450 = vunpack.c.l.b16 %v411
    %v451 = vunpack.c.l.b16 %v412
    %v452 = vunpack.c.l.b16 %v413
    %v453 = vunpack.c.l.b16 %v414
    %v454 = vunpack.c.l.b16 %v415
    %v455 = vunpack.c.l.b16 %v416
    %v456 = vpack.c.b16 %v441, %v440
    %v457 = vpack.c.b16 %v443, %v442
    %v458 = vpack.c.b16 %v445, %v444
    %v459 = vpack.c.b16 %v447, %v446
    %v460 = vpack.c.b16 %v449, %v448
    %v461 = vpack.c.b16 %v451, %v450
    %v462 = vpack.c.b16 %v453, %v452
    %v463 = vpack.c.b16 %v455, %v454
    %472 = vmatprep.subr.bf16.mxu0 0
    %473 = vmatpush1.bf16.msra.mxu0 %v456
    %474 = vmatprep.subr.bf16.mxu0 0
    %475 = vmatpush1.bf16.msra.mxu0 %v457
    %476 = vmatprep.subr.bf16.mxu0 0
    %477 = vmatpush1.bf16.msra.mxu0 %v458
    %478 = vmatprep.subr.bf16.mxu0 0
    %479 = vmatpush1.bf16.msra.mxu0 %v459
    %480 = vmatprep.subr.bf16.mxu0 0
    %481 = vmatpush1.bf16.msra.mxu0 %v460
    %482 = vmatprep.subr.bf16.mxu0 0
    %483 = vmatpush1.bf16.msra.mxu0 %v461
    %484 = vmatprep.subr.bf16.mxu0 0
    %485 = vmatpush1.bf16.msra.mxu0 %v462
    %486 = vmatprep.subr.bf16.mxu0 0
    %487 = vmatpush1.bf16.msra.mxu0 %v463
    %488 = vmatprep.subr.bf16.mxu0 0
    %489 = vmatpush1.bf16.msra.mxu0 0
    %490 = vmatprep.subr.bf16.mxu0 0
    %491 = vmatpush1.bf16.msra.mxu0 0
    %492 = vmatprep.subr.bf16.mxu0 0
    %493 = vmatpush1.bf16.msra.mxu0 0
    %494 = vmatprep.subr.bf16.mxu0 0
    %495 = vmatpush1.bf16.msra.mxu0 0
    %496 = vmatprep.subr.bf16.mxu0 0
    %497 = vmatpush1.bf16.msra.mxu0 0
    %498 = vmatprep.subr.bf16.mxu0 0
    %499 = vmatpush1.bf16.msra.mxu0 0
    %500 = vmatprep.subr.bf16.mxu0 0
    %501 = vmatpush1.bf16.msra.mxu0 0
    %502 = vmatprep.subr.bf16.mxu0 0
    %503 = vmatpush1.bf16.msra.mxu0 0
    %504 = vmatprep.mubr.bf16.mxu0 0
    %505 = vmatmul.mubr.bf16.gmra.mrb[0].mxu0 %v393
    %v506 = vpop.f32.mrb[0].mxu0
    %v507 = vadd.f32 %v422, %v506
    %v508 = vpop.f32.mrb[0].mxu0
    %v509 = vpop.f32.mrb[0].mxu0
    %v510 = vadd.f32 %v422, %v509
    %v511 = vpop.f32.mrb[0].mxu0
    %512 = vmatprep.mubr.bf16.mxu0 0
    %513 = vmatmul.mubr.bf16.gmra.mrb[0].mxu0 %v394
    %v514 = vpop.f32.mrb[0].mxu0
    %v515 = vadd.f32 %v422, %v514
    %v516 = vpop.f32.mrb[0].mxu0
    %v517 = vpop.f32.mrb[0].mxu0
    %v518 = vadd.f32 %v422, %v517
    %v519 = vpop.f32.mrb[0].mxu0
    %520 = vmatprep.mubr.bf16.mxu0 0
    %521 = vmatmul.mubr.bf16.gmra.mrb[0].mxu0 %v395
    %v522 = vpop.f32.mrb[0].mxu0
    %v523 = vadd.f32 %v422, %v522
    %v524 = vpop.f32.mrb[0].mxu0
    %v525 = vpop.f32.mrb[0].mxu0
    %v526 = vadd.f32 %v422, %v525
    %v527 = vpop.f32.mrb[0].mxu0
    %528 = vmatprep.mubr.bf16.mxu0 0
    %529 = vmatmul.mubr.bf16.gmra.mrb[0].mxu0 %v396
    %v530 = vpop.f32.mrb[0].mxu0
    %v531 = vadd.f32 %v422, %v530
    %v532 = vpop.f32.mrb[0].mxu0
    %v533 = vpop.f32.mrb[0].mxu0
    %v534 = vadd.f32 %v422, %v533
    %v535 = vpop.f32.mrb[0].mxu0
    %536 = vmatprep.mubr.bf16.mxu0 0
    %537 = vmatmul.mubr.bf16.gmra.mrb[0].mxu0 %v397
    %v538 = vpop.f32.mrb[0].mxu0
    %v539 = vadd.f32 %v422, %v538
    %v540 = vpop.f32.mrb[0].mxu0
    %v541 = vpop.f32.mrb[0].mxu0
    %v542 = vadd.f32 %v422, %v541
    %v543 = vpop.f32.mrb[0].mxu0
    %544 = vmatprep.mubr.bf16.mxu0 0
    %545 = vmatmul.mubr.bf16.gmra.mrb[0].mxu0 %v398
    %v546 = vpop.f32.mrb[0].mxu0
    %v547 = vadd.f32 %v422, %v546
    %v548 = vpop.f32.mrb[0].mxu0
    %v549 = vpop.f32.mrb[0].mxu0
    %v550 = vadd.f32 %v422, %v549
    %v551 = vpop.f32.mrb[0].mxu0
    %552 = vmatprep.mubr.bf16.mxu0 0
    %553 = vmatmul.mubr.bf16.gmra.mrb[0].mxu0 %v399
    %v554 = vpop.f32.mrb[0].mxu0
    %v555 = vadd.f32 %v422, %v554
    %v556 = vpop.f32.mrb[0].mxu0
    %v557 = vpop.f32.mrb[0].mxu0
    %v558 = vadd.f32 %v422, %v557
    %v559 = vpop.f32.mrb[0].mxu0
    %560 = vmatprep.mubr.bf16.mxu0 0
    %561 = vmatmul.mubr.bf16.gmra.mrb[0].mxu0 %v400
    %v562 = vpop.f32.mrb[0].mxu0
    %v563 = vadd.f32 %v422, %v562
    %v564 = vpop.f32.mrb[0].mxu0
    %v565 = vpop.f32.mrb[0].mxu0
    %v566 = vadd.f32 %v422, %v565
    %v567 = vpop.f32.mrb[0].mxu0
    %568 = vdwg.mxu0
    %v569 = vmax.f32 %v507, 0.0
    %v570 = vmax.f32 %v510, 0.0
    %v571 = vmax.f32 %v515, 0.0
    %v572 = vmax.f32 %v518, 0.0
    %v573 = vmax.f32 %v523, 0.0
    %v574 = vmax.f32 %v526, 0.0
    %v575 = vmax.f32 %v531, 0.0
    %v576 = vmax.f32 %v534, 0.0
    %v577 = vmax.f32 %v539, 0.0
    %v578 = vmax.f32 %v542, 0.0
    %v579 = vmax.f32 %v547, 0.0
    %v580 = vmax.f32 %v550, 0.0
    %v581 = vmax.f32 %v555, 0.0
    %v582 = vmax.f32 %v558, 0.0
    %v583 = vmax.f32 %v563, 0.0
    %v584 = vmax.f32 %v566, 0.0
    %v585 = vpack.c.bf16 %v570, %v569
    %v586 = vpack.c.bf16 %v572, %v571
    %v587 = vpack.c.bf16 %v574, %v573
    %v588 = vpack.c.bf16 %v576, %v575
    %v589 = vpack.c.bf16 %v578, %v577
    %v590 = vpack.c.bf16 %v580, %v579
    %v591 = vpack.c.bf16 %v582, %v581
    %v592 = vpack.c.bf16 %v584, %v583
    %v593 = vld [vmem:[%s7] sm:$0xf]
    %v594 = vld [vmem:[%s7 + $0x4] sm:$0xf]
    %v595 = vld [vmem:[%s7 + $0x8] sm:$0xf]
    %v596 = vld [vmem:[%s7 + $0xc] sm:$0xf]
    %v597 = vld [vmem:[%s7 + $0x10] sm:$0xf]
    %v598 = vld [vmem:[%s7 + $0x14] sm:$0xf]
    %v599 = vld [vmem:[%s7 + $0x18] sm:$0xf]
    %v600 = vld [vmem:[%s7 + $0x1c] sm:$0xf]
    %v601 = vld [vmem:[%s7 + $0x20] sm:$0xf]
    %v602 = vld [vmem:[%s7 + $0x24] sm:$0xf]
    %v603 = vld [vmem:[%s7 + $0x28] sm:$0xf]
    %v604 = vld [vmem:[%s7 + $0x2c] sm:$0xf]
    %v605 = vld [vmem:[%s7 + $0x30] sm:$0xf]
    %v606 = vld [vmem:[%s7 + $0x34] sm:$0xf]
    %v607 = vld [vmem:[%s7 + $0x38] sm:$0xf]
    %v608 = vld [vmem:[%s7 + $0x3c] sm:$0xf]
    %v609 = vld [vmem:[%s8] sm:$0x1]
    %v611 = vlaneseq
    %v612 = vshrl.u32 %v611, 7
    %v613 = vsub.s32 0, %v612
    %v614 = vrot.slane %v609, %v613
    %v632 = vunpack.c.l.b16 %v593
    %v633 = vunpack.c.l.b16 %v594
    %v634 = vunpack.c.l.b16 %v595
    %v635 = vunpack.c.l.b16 %v596
    %v636 = vunpack.c.l.b16 %v597
    %v637 = vunpack.c.l.b16 %v598
    %v638 = vunpack.c.l.b16 %v599
    %v639 = vunpack.c.l.b16 %v600
    %v640 = vunpack.c.l.b16 %v601
    %v641 = vunpack.c.l.b16 %v602
    %v642 = vunpack.c.l.b16 %v603
    %v643 = vunpack.c.l.b16 %v604
    %v644 = vunpack.c.l.b16 %v605
    %v645 = vunpack.c.l.b16 %v606
    %v646 = vunpack.c.l.b16 %v607
    %v647 = vunpack.c.l.b16 %v608
    %v648 = vpack.c.b16 %v633, %v632
    %v649 = vpack.c.b16 %v635, %v634
    %v650 = vpack.c.b16 %v637, %v636
    %v651 = vpack.c.b16 %v639, %v638
    %v652 = vpack.c.b16 %v641, %v640
    %v653 = vpack.c.b16 %v643, %v642
    %v654 = vpack.c.b16 %v645, %v644
    %v655 = vpack.c.b16 %v647, %v646
    %664 = vmatprep.subr.bf16.mxu0 0
    %665 = vmatpush1.bf16.msra.mxu0 %v648
    %666 = vmatprep.subr.bf16.mxu0 0
    %667 = vmatpush1.bf16.msra.mxu0 %v649
    %668 = vmatprep.subr.bf16.mxu0 0
    %669 = vmatpush1.bf16.msra.mxu0 %v650
    %670 = vmatprep.subr.bf16.mxu0 0
    %671 = vmatpush1.bf16.msra.mxu0 %v651
    %672 = vmatprep.subr.bf16.mxu0 0
    %673 = vmatpush1.bf16.msra.mxu0 %v652
    %674 = vmatprep.subr.bf16.mxu0 0
    %675 = vmatpush1.bf16.msra.mxu0 %v653
    %676 = vmatprep.subr.bf16.mxu0 0
    %677 = vmatpush1.bf16.msra.mxu0 %v654
    %678 = vmatprep.subr.bf16.mxu0 0
    %679 = vmatpush1.bf16.msra.mxu0 %v655
    %680 = vmatprep.subr.bf16.mxu0 0
    %681 = vmatpush1.bf16.msra.mxu0 0
    %682 = vmatprep.subr.bf16.mxu0 0
    %683 = vmatpush1.bf16.msra.mxu0 0
    %684 = vmatprep.subr.bf16.mxu0 0
    %685 = vmatpush1.bf16.msra.mxu0 0
    %686 = vmatprep.subr.bf16.mxu0 0
    %687 = vmatpush1.bf16.msra.mxu0 0
    %688 = vmatprep.subr.bf16.mxu0 0
    %689 = vmatpush1.bf16.msra.mxu0 0
    %690 = vmatprep.subr.bf16.mxu0 0
    %691 = vmatpush1.bf16.msra.mxu0 0
    %692 = vmatprep.subr.bf16.mxu0 0
    %693 = vmatpush1.bf16.msra.mxu0 0
    %694 = vmatprep.subr.bf16.mxu0 0
    %695 = vmatpush1.bf16.msra.mxu0 0
    %696 = vmatprep.mubr.bf16.mxu0 0
    %697 = vmatmul.mubr.bf16.gmra.mrb[0].mxu0 %v585
    %v698 = vpop.f32.mrb[0].mxu0
    %v699 = vadd.f32 %v614, %v698
    %v700 = vpop.f32.mrb[0].mxu0
    %v701 = vpop.f32.mrb[0].mxu0
    %v702 = vadd.f32 %v614, %v701
    %v703 = vpop.f32.mrb[0].mxu0
    %704 = vmatprep.mubr.bf16.mxu0 0
    %705 = vmatmul.mubr.bf16.gmra.mrb[0].mxu0 %v586
    %v706 = vpop.f32.mrb[0].mxu0
    %v707 = vadd.f32 %v614, %v706
    %v708 = vpop.f32.mrb[0].mxu0
    %v709 = vpop.f32.mrb[0].mxu0
    %v710 = vadd.f32 %v614, %v709
    %v711 = vpop.f32.mrb[0].mxu0
    %712 = vmatprep.mubr.bf16.mxu0 0
    %713 = vmatmul.mubr.bf16.gmra.mrb[0].mxu0 %v587
    %v714 = vpop.f32.mrb[0].mxu0
    %v715 = vadd.f32 %v614, %v714
    %v716 = vpop.f32.mrb[0].mxu0
    %v717 = vpop.f32.mrb[0].mxu0
    %v718 = vadd.f32 %v614, %v717
    %v719 = vpop.f32.mrb[0].mxu0
    %720 = vmatprep.mubr.bf16.mxu0 0
    %721 = vmatmul.mubr.bf16.gmra.mrb[0].mxu0 %v588
    %v722 = vpop.f32.mrb[0].mxu0
    %v723 = vadd.f32 %v614, %v722
    %v724 = vpop.f32.mrb[0].mxu0
    %v725 = vpop.f32.mrb[0].mxu0
    %v726 = vadd.f32 %v614, %v725
    %v727 = vpop.f32.mrb[0].mxu0
    %728 = vmatprep.mubr.bf16.mxu0 0
    %729 = vmatmul.mubr.bf16.gmra.mrb[0].mxu0 %v589
    %v730 = vpop.f32.mrb[0].mxu0
    %v731 = vadd.f32 %v614, %v730
    %v732 = vpop.f32.mrb[0].mxu0
    %v733 = vpop.f32.mrb[0].mxu0
    %v734 = vadd.f32 %v614, %v733
    %v735 = vpop.f32.mrb[0].mxu0
    %736 = vmatprep.mubr.bf16.mxu0 0
    %737 = vmatmul.mubr.bf16.gmra.mrb[0].mxu0 %v590
    %v738 = vpop.f32.mrb[0].mxu0
    %v739 = vadd.f32 %v614, %v738
    %v740 = vpop.f32.mrb[0].mxu0
    %v741 = vpop.f32.mrb[0].mxu0
    %v742 = vadd.f32 %v614, %v741
    %v743 = vpop.f32.mrb[0].mxu0
    %744 = vmatprep.mubr.bf16.mxu0 0
    %745 = vmatmul.mubr.bf16.gmra.mrb[0].mxu0 %v591
    %v746 = vpop.f32.mrb[0].mxu0
    %v747 = vadd.f32 %v614, %v746
    %v748 = vpop.f32.mrb[0].mxu0
    %v749 = vpop.f32.mrb[0].mxu0
    %v750 = vadd.f32 %v614, %v749
    %v751 = vpop.f32.mrb[0].mxu0
    %752 = vmatprep.mubr.bf16.mxu0 0
    %753 = vmatmul.mubr.bf16.gmra.mrb[0].mxu0 %v592
    %v754 = vpop.f32.mrb[0].mxu0
    %v755 = vadd.f32 %v614, %v754
    %v756 = vpop.f32.mrb[0].mxu0
    %v757 = vpop.f32.mrb[0].mxu0
    %v758 = vadd.f32 %v614, %v757
    %v759 = vpop.f32.mrb[0].mxu0
    %760 = vdwg.mxu0
    %761 = vst [vmem:[%s9] sm:$0xff] %v699
    %762 = vst [vmem:[%s9 + $0x8] sm:$0xff] %v702
    %763 = vst [vmem:[%s9 + $0x10] sm:$0xff] %v707
    %764 = vst [vmem:[%s9 + $0x18] sm:$0xff] %v710
    %765 = vst [vmem:[%s9 + $0x20] sm:$0xff] %v715
    %766 = vst [vmem:[%s9 + $0x28] sm:$0xff] %v718
    %767 = vst [vmem:[%s9 + $0x30] sm:$0xff] %v723
    %768 = vst [vmem:[%s9 + $0x38] sm:$0xff] %v726
    %769 = vst [vmem:[%s9 + $0x40] sm:$0xff] %v731
    %770 = vst [vmem:[%s9 + $0x48] sm:$0xff] %v734
    %771 = vst [vmem:[%s9 + $0x50] sm:$0xff] %v739
    %772 = vst [vmem:[%s9 + $0x58] sm:$0xff] %v742
    %773 = vst [vmem:[%s9 + $0x60] sm:$0xff] %v747
    %774 = vst [vmem:[%s9 + $0x68] sm:$0xff] %v750
    %775 = vst [vmem:[%s9 + $0x70] sm:$0xff] %v755
    %776 = vst [vmem:[%s9 + $0x78] sm:$0xff] %v758
  $region41: #{predictor_forward_gin.3} parent=0 // pred_fallthru
    _
  // Predicated region
  $region42: #{predictor_forward_gin.3} parent=0 // pred_check
    _
  $region43: #{predictor_forward_gin.3} parent=0 // pred_check_branch
    %778 = sbr.rel (0) target = $region45
  $region44: #{predictor_forward_gin.3} parent=0 // pred_region
    _
  $region45: #{predictor_forward_gin.3} parent=0 // pred_fallthru
    _
  // Predicated region
  $region46: #{predictor_forward_gin.3} parent=0 // pred_check
    _
  $region47: #{predictor_forward_gin.3} parent=0 // pred_check_branch
    %780 = sbr.rel (0) target = $region49
  $region48: #{predictor_forward_gin.3} parent=0 // pred_region
    _
  $region49: #{predictor_forward_gin.3} parent=0 // pred_fallthru
    _

</llo_original>
